<compile_context>
chip_gen: v7x
topology: tpu7x:2x2x1
jax: 0.10.0
libtpu: 0.0.40
codegen_flags: <defaults>
</compile_context>

<pallas_src>
import functools

import jax
import jax.numpy as jnp
import numpy as np
from jax.experimental import pallas as pl
from jax.experimental.pallas import tpu as pltpu

EPS = 1e-5  # nn.LayerNorm default eps


# ----------------------------- Pallas kernel ------------------------------ #

def _layernorm(x, g, b):
    mu = jnp.mean(x, axis=-1, keepdims=True)
    var = jnp.mean((x - mu) ** 2, axis=-1, keepdims=True)
    return (x - mu) * jax.lax.rsqrt(var + EPS) * g + b


def fused_layer_kernel(q_ref, k_ref, v_ref, wqkv_ref, wo_ref, w1_ref, w2_ref, pv_ref,
                       o_ref, *, H, Dh, E, compute_dtype):
    """One grid step = one batch element n: full attention + FFN + both LayerNorms."""
    f32 = jnp.float32
    cdt = compute_dtype

    def mm(x, w):  # MXU matmul, (in, out)-oriented weight, f32 accumulation
        return jnp.dot(x.astype(cdt), w.astype(cdt), preferred_element_type=f32)

    Qf = q_ref[...]                    # (L, E) f32 — this batch's queries
    Kf = k_ref[...]                    # (S, E)
    Vf = v_ref[...]                    # (S, E)

    # Packed small parameters: rows = [bq, bk, bv, out_b, b2, g1, be1, g2, be2, b1]
    pk = pv_ref[...]                   # (10, max(E, 4E)) f32
    bq, bk, bv = pk[0:1, :E], pk[1:2, :E], pk[2:3, :E]
    ob, b2 = pk[3:4, :E], pk[4:5, :E]
    g1, be1 = pk[5:6, :E], pk[6:7, :E]
    g2, be2 = pk[7:8, :E], pk[8:9, :E]
    b1 = pk[9:10, : 4 * E]

    # --- in-projections: 3 full-width MXU matmuls ---
    scale = 1.0 / (float(Dh) ** 0.5)
    q = (mm(Qf, wqkv_ref[0]) + bq) * scale     # (L, E)
    k = mm(Kf, wqkv_ref[1]) + bk               # (S, E)
    v = mm(Vf, wqkv_ref[2]) + bv               # (S, E)

    # --- head split: heads become a leading batch dim (H, L|S, Dh) ---
    qh = jnp.stack([q[:, h * Dh:(h + 1) * Dh] for h in range(H)], axis=0)
    kh = jnp.stack([k[:, h * Dh:(h + 1) * Dh] for h in range(H)], axis=0)
    vh = jnp.stack([v[:, h * Dh:(h + 1) * Dh] for h in range(H)], axis=0)

    # --- attention: two batched contractions over all heads at once ---
    s = jnp.einsum("hld,hsd->hls", qh.astype(cdt), kh.astype(cdt),
                   preferred_element_type=f32)                       # (H, L, S)
    s = s - jnp.max(s, axis=-1, keepdims=True)
    p = jnp.exp(s)
    p = p / jnp.sum(p, axis=-1, keepdims=True)                       # exact softmax
    ctx_h = jnp.einsum("hls,hsd->hld", p.astype(cdt), vh.astype(cdt),
                       preferred_element_type=f32)                   # (H, L, Dh)

    # merge heads back to lane-dense (L, E) for a single full-width out_proj
    ctx = jnp.concatenate([ctx_h[h] for h in range(H)], axis=-1)     # (L, E)

    # --- out_proj + residual + norm1 ---
    attn = mm(ctx, wo_ref[...]) + ob
    x = _layernorm(Qf + attn, g1, be1)

    # --- FFN: relu(linear1) -> dropout(identity) -> linear2, residual + norm2 ---
    hdn = jnp.maximum(mm(x, w1_ref[...]) + b1, 0.0)
    ff = mm(hdn, w2_ref[...]) + b2
    o_ref[...] = _layernorm(x + ff, g2, be2).astype(o_ref.dtype)


# ------------------------------ Python wrapper ------------------------------ #

def custom_transformer_layer(Q, K, V, params, num_heads, compute_dtype=jnp.float32):
    L, N, E = Q.shape
    S = K.shape[0]
    H = num_heads
    Dh = E // H
    F = 4 * E

    # Batch-major token layout (row = n*L + l): each batch is a contiguous row slab,
    # last dim stays lane-dense E.
    Qb = Q.transpose(1, 0, 2).reshape(N * L, E)
    Kb = K.transpose(1, 0, 2).reshape(N * S, E)
    Vb = V.transpose(1, 0, 2).reshape(N * S, E)

    # One-time host-side weight prep (free at runtime / folded under jit):
    #   split packed in_proj, transpose everything to (in, out) — canonical MXU layout.
    wq, wk, wv = jnp.split(params["in_proj_w"], 3, axis=0)            # (E, E) (out,in)
    wqkv_t = jnp.stack([wq.T, wk.T, wv.T], axis=0).astype(compute_dtype)   # (3, E, E)
    wo_t = params["out_w"].T.astype(compute_dtype)                    # (E, E)
    w1_t = params["w1"].T.astype(compute_dtype)                       # (E, 4E)
    w2_t = params["w2"].T.astype(compute_dtype)                       # (4E, E)

    # Pack all tiny vectors into a single (10, max(E,4E)) slab -> one DMA.
    bq, bk, bv = jnp.split(params["in_proj_b"], 3)
    width = max(E, F)
    pad = lambda v: jnp.pad(v, (0, width - v.shape[0]))
    pvec = jnp.stack(
        [pad(bq), pad(bk), pad(bv), pad(params["out_b"]), pad(params["b2"]),
         pad(params["g1"]), pad(params["be1"]), pad(params["g2"]), pad(params["be2"]),
         pad(params["b1"])], axis=0).astype(jnp.float32)              # (10, width)

    kernel = functools.partial(fused_layer_kernel, H=H, Dh=Dh, E=E,
                               compute_dtype=compute_dtype)

    y = pl.pallas_call(
        kernel,
        grid=(N,),                                   # 'parallel' -> both TCs on v7x
        out_shape=jax.ShapeDtypeStruct((N * L, E), jnp.float32),
        in_specs=[
            pl.BlockSpec((L, E), lambda i: (i, 0)),          # Q rows of batch i
            pl.BlockSpec((S, E), lambda i: (i, 0)),          # K rows of batch i
            pl.BlockSpec((S, E), lambda i: (i, 0)),          # V rows of batch i
            pl.BlockSpec((3, E, E), lambda i: (0, 0, 0)),    # stacked in_proj weights
            pl.BlockSpec((E, E), lambda i: (0, 0)),          # out_proj weight
            pl.BlockSpec((E, F), lambda i: (0, 0)),          # linear1 weight
            pl.BlockSpec((F, E), lambda i: (0, 0)),          # linear2 weight
            pl.BlockSpec((10, width), lambda i: (0, 0)),     # packed biases/gains
        ],
        out_specs=pl.BlockSpec((L, E), lambda i: (i, 0)),
        compiler_params=pltpu.CompilerParams(dimension_semantics=("parallel",)),
    )(Qb, Kb, Vb, wqkv_t, wo_t, w1_t, w2_t, pvec)

    # output.permute(1, 2, 0): (L, N, E) -> (N, E, L); y rows are n*L + l.
    return y.reshape(N, L, E).transpose(0, 2, 1)


# ------------------------------ pure-JAX reference --------------------------- #

def reference(Q, K, V, p, H):
    L, N, E = Q.shape
    S = K.shape[0]
    Dh = E // H
    wq, wk, wv = jnp.split(p["in_proj_w"], 3, axis=0)
    bq, bk, bv = jnp.split(p["in_proj_b"], 3)
    q = Q.reshape(L * N, E) @ wq.T + bq
    k = K.reshape(S * N, E) @ wk.T + bk
    v = V.reshape(S * N, E) @ wv.T + bv
    qh = (q * (Dh ** -0.5)).reshape(L, N * H, Dh).transpose(1, 0, 2)
    kh = k.reshape(S, N * H, Dh).transpose(1, 0, 2)
    vh = v.reshape(S, N * H, Dh).transpose(1, 0, 2)
    s = jnp.einsum("bld,bsd->bls", qh, kh)
    a = jax.nn.softmax(s, axis=-1)
    ctx = jnp.einsum("bls,bsd->bld", a, vh).transpose(1, 0, 2).reshape(L * N, E)
    attn = ctx @ p["out_w"].T + p["out_b"]

    def ln(x, g, b):
        mu = x.mean(-1, keepdims=True)
        var = ((x - mu) ** 2).mean(-1, keepdims=True)
        return (x - mu) / jnp.sqrt(var + EPS) * g + b

    x = ln(Q.reshape(L * N, E) + attn, p["g1"], p["be1"])
    h = jax.nn.relu(x @ p["w1"].T + p["b1"])
    ff = h @ p["w2"].T + p["b2"]
    y = ln(x + ff, p["g2"], p["be2"])
    return y.reshape(L, N, E).transpose(1, 2, 0)


# ------------------------------------ main ----------------------------------- #

if __name__ == "__main__":
    embed_dim, num_heads = 32, 4
    L, N = 8, 2  # seq_len, batch

    key = jax.random.PRNGKey(0)
    ks = jax.random.split(key, 11)

    def init(k, shape, scale=0.05):
        return (scale * jax.random.normal(k, shape)).astype(jnp.float32)

    params = dict(
        in_proj_w=init(ks[0], (3 * embed_dim, embed_dim)),
        in_proj_b=init(ks[1], (3 * embed_dim,)),
        out_w=init(ks[2], (embed_dim, embed_dim)),
        out_b=init(ks[3], (embed_dim,)),
        w1=init(ks[4], (4 * embed_dim, embed_dim)),
        b1=init(ks[5], (4 * embed_dim,)),
        w2=init(ks[6], (embed_dim, 4 * embed_dim)),
        b2=init(ks[7], (embed_dim,)),
        g1=jnp.ones((embed_dim,), jnp.float32),
        be1=jnp.zeros((embed_dim,), jnp.float32),
        g2=jnp.ones((embed_dim,), jnp.float32),
        be2=jnp.zeros((embed_dim,), jnp.float32),
    )

    Q = init(ks[8], (L, N, embed_dim), 1.0)
    K = init(ks[9], (L, N, embed_dim), 1.0)
    V = init(ks[10], (L, N, embed_dim), 1.0)

    # compute_dtype=jnp.bfloat16 is the v6e/v7x production setting; f32 here for exact
    # parity with the f32 PyTorch module.
    out = custom_transformer_layer(Q, K, V, params, num_heads,
                                   compute_dtype=jnp.float32)
    out = jax.block_until_ready(out)

    ref = reference(Q, K, V, params, num_heads)
    assert out.shape == (N, embed_dim, L), out.shape
    np.testing.assert_allclose(np.asarray(out), np.asarray(ref), rtol=1e-3, atol=1e-3)

    print("KERNEL_OK")
</pallas_src>

<mosaic_0001>
module attributes {stable_mosaic.version = 11 : i64} {
  func.func @fused_layer_kernel(%arg0: i32, %arg1: memref<8x32xf32, #tpu.memory_space<vmem>>, %arg2: memref<8x32xf32, #tpu.memory_space<vmem>>, %arg3: memref<8x32xf32, #tpu.memory_space<vmem>>, %arg4: memref<3x32x32xf32, #tpu.memory_space<vmem>>, %arg5: memref<32x32xf32, #tpu.memory_space<vmem>>, %arg6: memref<32x128xf32, #tpu.memory_space<vmem>>, %arg7: memref<128x32xf32, #tpu.memory_space<vmem>>, %arg8: memref<10x128xf32, #tpu.memory_space<vmem>>, %arg9: memref<8x32xf32, #tpu.memory_space<vmem>>) attributes {dimension_semantics = [#tpu.dimension_semantics<parallel>], iteration_bounds = array<i64: 2>, scalar_prefetch = 0 : i64, scratch_operands = 0 : i64, tpu.core_type = #tpu.core_type<tc>, window_params = [{transform_indices = @transform_0, window_bounds = array<i64: 8, 32>}, {transform_indices = @transform_1, window_bounds = array<i64: 8, 32>}, {transform_indices = @transform_2, window_bounds = array<i64: 8, 32>}, {pipeline_mode = #tpu.pipeline_mode<synchronous>, transform_indices = @transform_3, window_bounds = array<i64: 3, 32, 32>}, {pipeline_mode = #tpu.pipeline_mode<synchronous>, transform_indices = @transform_4, window_bounds = array<i64: 32, 32>}, {pipeline_mode = #tpu.pipeline_mode<synchronous>, transform_indices = @transform_5, window_bounds = array<i64: 32, 128>}, {pipeline_mode = #tpu.pipeline_mode<synchronous>, transform_indices = @transform_6, window_bounds = array<i64: 128, 32>}, {pipeline_mode = #tpu.pipeline_mode<synchronous>, transform_indices = @transform_7, window_bounds = array<i64: 10, 128>}, {transform_indices = @transform_8, window_bounds = array<i64: 8, 32>}]} {
    %c0 = arith.constant 0 : index
    %c0_0 = arith.constant 0 : index
    %0 = vector.load %arg1[%c0, %c0_0] : memref<8x32xf32, #tpu.memory_space<vmem>>, vector<8x32xf32>
    %c0_1 = arith.constant 0 : index
    %c0_2 = arith.constant 0 : index
    %1 = vector.load %arg2[%c0_1, %c0_2] : memref<8x32xf32, #tpu.memory_space<vmem>>, vector<8x32xf32>
    %c0_3 = arith.constant 0 : index
    %c0_4 = arith.constant 0 : index
    %2 = vector.load %arg3[%c0_3, %c0_4] : memref<8x32xf32, #tpu.memory_space<vmem>>, vector<8x32xf32>
    %c0_5 = arith.constant 0 : index
    %c0_6 = arith.constant 0 : index
    %3 = vector.load %arg8[%c0_5, %c0_6] : memref<10x128xf32, #tpu.memory_space<vmem>>, vector<10x128xf32>
    %4 = vector.extract_strided_slice %3 {offsets = [0, 0], sizes = [1, 32], strides = [1, 1]} : vector<10x128xf32> to vector<1x32xf32>
    %5 = vector.extract_strided_slice %3 {offsets = [1, 0], sizes = [1, 32], strides = [1, 1]} : vector<10x128xf32> to vector<1x32xf32>
    %6 = vector.extract_strided_slice %3 {offsets = [2, 0], sizes = [1, 32], strides = [1, 1]} : vector<10x128xf32> to vector<1x32xf32>
    %7 = vector.extract_strided_slice %3 {offsets = [3, 0], sizes = [1, 32], strides = [1, 1]} : vector<10x128xf32> to vector<1x32xf32>
    %8 = vector.extract_strided_slice %3 {offsets = [4, 0], sizes = [1, 32], strides = [1, 1]} : vector<10x128xf32> to vector<1x32xf32>
    %9 = vector.extract_strided_slice %3 {offsets = [5, 0], sizes = [1, 32], strides = [1, 1]} : vector<10x128xf32> to vector<1x32xf32>
    %10 = vector.extract_strided_slice %3 {offsets = [6, 0], sizes = [1, 32], strides = [1, 1]} : vector<10x128xf32> to vector<1x32xf32>
    %11 = vector.extract_strided_slice %3 {offsets = [7, 0], sizes = [1, 32], strides = [1, 1]} : vector<10x128xf32> to vector<1x32xf32>
    %12 = vector.extract_strided_slice %3 {offsets = [8, 0], sizes = [1, 32], strides = [1, 1]} : vector<10x128xf32> to vector<1x32xf32>
    %13 = vector.extract_strided_slice %3 {offsets = [9, 0], sizes = [1, 128], strides = [1, 1]} : vector<10x128xf32> to vector<1x128xf32>
    %c0_7 = arith.constant 0 : index
    %c0_8 = arith.constant 0 : index
    %c0_9 = arith.constant 0 : index
    %14 = vector.load %arg4[%c0_7, %c0_8, %c0_9] : memref<3x32x32xf32, #tpu.memory_space<vmem>>, vector<1x32x32xf32>
    %15 = vector.shape_cast %14 : vector<1x32x32xf32> to vector<32x32xf32>
    %cst = arith.constant dense<0.000000e+00> : vector<8x32xf32>
    %16 = tpu.matmul %0, %15, %cst {dimension_numbers = #tpu.dot_dimension_numbers<[1], [0], [0], [1], [0, 0, 1, 1], [], []>} : vector<8x32xf32>, vector<32x32xf32>, vector<8x32xf32> -> vector<8x32xf32>
    %17 = vector.broadcast %4 : vector<1x32xf32> to vector<8x32xf32>
    %18 = arith.addf %16, %17 : vector<8x32xf32>
    %cst_10 = arith.constant 0.353553385 : f32
    %19 = vector.broadcast %cst_10 : f32 to vector<8x32xf32>
    %20 = arith.mulf %18, %19 : vector<8x32xf32>
    %c1 = arith.constant 1 : index
    %c0_11 = arith.constant 0 : index
    %c0_12 = arith.constant 0 : index
    %21 = vector.load %arg4[%c1, %c0_11, %c0_12] : memref<3x32x32xf32, #tpu.memory_space<vmem>>, vector<1x32x32xf32>
    %22 = vector.shape_cast %21 : vector<1x32x32xf32> to vector<32x32xf32>
    %cst_13 = arith.constant dense<0.000000e+00> : vector<8x32xf32>
    %23 = tpu.matmul %1, %22, %cst_13 {dimension_numbers = #tpu.dot_dimension_numbers<[1], [0], [0], [1], [0, 0, 1, 1], [], []>} : vector<8x32xf32>, vector<32x32xf32>, vector<8x32xf32> -> vector<8x32xf32>
    %24 = vector.broadcast %5 : vector<1x32xf32> to vector<8x32xf32>
    %25 = arith.addf %23, %24 : vector<8x32xf32>
    %c2 = arith.constant 2 : index
    %c0_14 = arith.constant 0 : index
    %c0_15 = arith.constant 0 : index
    %26 = vector.load %arg4[%c2, %c0_14, %c0_15] : memref<3x32x32xf32, #tpu.memory_space<vmem>>, vector<1x32x32xf32>
    %27 = vector.shape_cast %26 : vector<1x32x32xf32> to vector<32x32xf32>
    %cst_16 = arith.constant dense<0.000000e+00> : vector<8x32xf32>
    %28 = tpu.matmul %2, %27, %cst_16 {dimension_numbers = #tpu.dot_dimension_numbers<[1], [0], [0], [1], [0, 0, 1, 1], [], []>} : vector<8x32xf32>, vector<32x32xf32>, vector<8x32xf32> -> vector<8x32xf32>
    %29 = vector.broadcast %6 : vector<1x32xf32> to vector<8x32xf32>
    %30 = arith.addf %28, %29 : vector<8x32xf32>
    %31 = vector.extract_strided_slice %20 {offsets = [0, 0], sizes = [8, 8], strides = [1, 1]} : vector<8x32xf32> to vector<8x8xf32>
    %32 = vector.extract_strided_slice %20 {offsets = [0, 8], sizes = [8, 8], strides = [1, 1]} : vector<8x32xf32> to vector<8x8xf32>
    %33 = vector.extract_strided_slice %20 {offsets = [0, 16], sizes = [8, 8], strides = [1, 1]} : vector<8x32xf32> to vector<8x8xf32>
    %34 = vector.extract_strided_slice %20 {offsets = [0, 24], sizes = [8, 8], strides = [1, 1]} : vector<8x32xf32> to vector<8x8xf32>
    %35 = vector.shape_cast %31 : vector<8x8xf32> to vector<1x8x8xf32>
    %36 = vector.shape_cast %32 : vector<8x8xf32> to vector<1x8x8xf32>
    %37 = vector.shape_cast %33 : vector<8x8xf32> to vector<1x8x8xf32>
    %38 = vector.shape_cast %34 : vector<8x8xf32> to vector<1x8x8xf32>
    %39 = tpu.concatenate %35, %36, %37, %38 in 0 : vector<1x8x8xf32>, vector<1x8x8xf32>, vector<1x8x8xf32>, vector<1x8x8xf32> -> vector<4x8x8xf32>
    %40 = vector.extract_strided_slice %25 {offsets = [0, 0], sizes = [8, 8], strides = [1, 1]} : vector<8x32xf32> to vector<8x8xf32>
    %41 = vector.extract_strided_slice %25 {offsets = [0, 8], sizes = [8, 8], strides = [1, 1]} : vector<8x32xf32> to vector<8x8xf32>
    %42 = vector.extract_strided_slice %25 {offsets = [0, 16], sizes = [8, 8], strides = [1, 1]} : vector<8x32xf32> to vector<8x8xf32>
    %43 = vector.extract_strided_slice %25 {offsets = [0, 24], sizes = [8, 8], strides = [1, 1]} : vector<8x32xf32> to vector<8x8xf32>
    %44 = vector.shape_cast %40 : vector<8x8xf32> to vector<1x8x8xf32>
    %45 = vector.shape_cast %41 : vector<8x8xf32> to vector<1x8x8xf32>
    %46 = vector.shape_cast %42 : vector<8x8xf32> to vector<1x8x8xf32>
    %47 = vector.shape_cast %43 : vector<8x8xf32> to vector<1x8x8xf32>
    %48 = tpu.concatenate %44, %45, %46, %47 in 0 : vector<1x8x8xf32>, vector<1x8x8xf32>, vector<1x8x8xf32>, vector<1x8x8xf32> -> vector<4x8x8xf32>
    %49 = vector.extract_strided_slice %30 {offsets = [0, 0], sizes = [8, 8], strides = [1, 1]} : vector<8x32xf32> to vector<8x8xf32>
    %50 = vector.extract_strided_slice %30 {offsets = [0, 8], sizes = [8, 8], strides = [1, 1]} : vector<8x32xf32> to vector<8x8xf32>
    %51 = vector.extract_strided_slice %30 {offsets = [0, 16], sizes = [8, 8], strides = [1, 1]} : vector<8x32xf32> to vector<8x8xf32>
    %52 = vector.extract_strided_slice %30 {offsets = [0, 24], sizes = [8, 8], strides = [1, 1]} : vector<8x32xf32> to vector<8x8xf32>
    %53 = vector.shape_cast %49 : vector<8x8xf32> to vector<1x8x8xf32>
    %54 = vector.shape_cast %50 : vector<8x8xf32> to vector<1x8x8xf32>
    %55 = vector.shape_cast %51 : vector<8x8xf32> to vector<1x8x8xf32>
    %56 = vector.shape_cast %52 : vector<8x8xf32> to vector<1x8x8xf32>
    %57 = tpu.concatenate %53, %54, %55, %56 in 0 : vector<1x8x8xf32>, vector<1x8x8xf32>, vector<1x8x8xf32>, vector<1x8x8xf32> -> vector<4x8x8xf32>
    "tpu.trace_start"() <{level = 10 : i32, message = "hld,hsd->hls"}> : () -> ()
    %cst_17 = arith.constant dense<0.000000e+00> : vector<4x8x8xf32>
    %58 = tpu.matmul %39, %48, %cst_17 {dimension_numbers = #tpu.dot_dimension_numbers<[2], [2], [1], [1], [0, 0, 0, 1, 1, 1], [0], [0]>} : vector<4x8x8xf32>, vector<4x8x8xf32>, vector<4x8x8xf32> -> vector<4x8x8xf32>
    "tpu.trace_stop"() : () -> ()
    %cst_18 = arith.constant dense<0xFF800000> : vector<4x8xf32>
    %59 = vector.multi_reduction <maximumf>, %58, %cst_18 [2] : vector<4x8x8xf32> to vector<4x8xf32>
    %60 = vector.shape_cast %59 : vector<4x8xf32> to vector<4x8x1xf32>
    %61 = vector.broadcast %60 : vector<4x8x1xf32> to vector<4x8x8xf32>
    %62 = arith.subf %58, %61 : vector<4x8x8xf32>
    %63 = math.exp %62 : vector<4x8x8xf32>
    %cst_19 = arith.constant dense<0.000000e+00> : vector<4x8xf32>
    %64 = vector.multi_reduction <add>, %63, %cst_19 [2] : vector<4x8x8xf32> to vector<4x8xf32>
    %65 = vector.shape_cast %64 : vector<4x8xf32> to vector<4x8x1xf32>
    %66 = vector.broadcast %65 : vector<4x8x1xf32> to vector<4x8x8xf32>
    %67 = arith.divf %63, %66 : vector<4x8x8xf32>
    "tpu.trace_start"() <{level = 10 : i32, message = "hls,hsd->hld"}> : () -> ()
    %cst_20 = arith.constant dense<0.000000e+00> : vector<4x8x8xf32>
    %68 = tpu.matmul %67, %57, %cst_20 {dimension_numbers = #tpu.dot_dimension_numbers<[2], [1], [1], [2], [0, 0, 0, 1, 1, 2], [0], [0]>} : vector<4x8x8xf32>, vector<4x8x8xf32>, vector<4x8x8xf32> -> vector<4x8x8xf32>
    "tpu.trace_stop"() : () -> ()
    %69 = vector.extract_strided_slice %68 {offsets = [0, 0, 0], sizes = [1, 8, 8], strides = [1, 1, 1]} : vector<4x8x8xf32> to vector<1x8x8xf32>
    %70 = vector.shape_cast %69 : vector<1x8x8xf32> to vector<8x8xf32>
    %71 = vector.extract_strided_slice %68 {offsets = [1, 0, 0], sizes = [1, 8, 8], strides = [1, 1, 1]} : vector<4x8x8xf32> to vector<1x8x8xf32>
    %72 = vector.shape_cast %71 : vector<1x8x8xf32> to vector<8x8xf32>
    %73 = vector.extract_strided_slice %68 {offsets = [2, 0, 0], sizes = [1, 8, 8], strides = [1, 1, 1]} : vector<4x8x8xf32> to vector<1x8x8xf32>
    %74 = vector.shape_cast %73 : vector<1x8x8xf32> to vector<8x8xf32>
    %75 = vector.extract_strided_slice %68 {offsets = [3, 0, 0], sizes = [1, 8, 8], strides = [1, 1, 1]} : vector<4x8x8xf32> to vector<1x8x8xf32>
    %76 = vector.shape_cast %75 : vector<1x8x8xf32> to vector<8x8xf32>
    %77 = tpu.concatenate %70, %72, %74, %76 in 1 : vector<8x8xf32>, vector<8x8xf32>, vector<8x8xf32>, vector<8x8xf32> -> vector<8x32xf32>
    %c0_21 = arith.constant 0 : index
    %c0_22 = arith.constant 0 : index
    %78 = vector.load %arg5[%c0_21, %c0_22] : memref<32x32xf32, #tpu.memory_space<vmem>>, vector<32x32xf32>
    %cst_23 = arith.constant dense<0.000000e+00> : vector<8x32xf32>
    %79 = tpu.matmul %77, %78, %cst_23 {dimension_numbers = #tpu.dot_dimension_numbers<[1], [0], [0], [1], [0, 0, 1, 1], [], []>} : vector<8x32xf32>, vector<32x32xf32>, vector<8x32xf32> -> vector<8x32xf32>
    %80 = vector.broadcast %7 : vector<1x32xf32> to vector<8x32xf32>
    %81 = arith.addf %79, %80 : vector<8x32xf32>
    %82 = arith.addf %0, %81 : vector<8x32xf32>
    %cst_24 = arith.constant dense<0.000000e+00> : vector<8xf32>
    %83 = vector.multi_reduction <add>, %82, %cst_24 [1] : vector<8x32xf32> to vector<8xf32>
    %84 = vector.shape_cast %83 : vector<8xf32> to vector<8x1xf32>
    %cst_25 = arith.constant 3.200000e+01 : f32
    %85 = vector.broadcast %cst_25 : f32 to vector<8x1xf32>
    %86 = arith.divf %84, %85 : vector<8x1xf32>
    %87 = vector.broadcast %86 : vector<8x1xf32> to vector<8x32xf32>
    %88 = arith.subf %82, %87 : vector<8x32xf32>
    %89 = arith.mulf %88, %88 : vector<8x32xf32>
    %cst_26 = arith.constant dense<0.000000e+00> : vector<8xf32>
    %90 = vector.multi_reduction <add>, %89, %cst_26 [1] : vector<8x32xf32> to vector<8xf32>
    %91 = vector.shape_cast %90 : vector<8xf32> to vector<8x1xf32>
    %cst_27 = arith.constant 3.200000e+01 : f32
    %92 = vector.broadcast %cst_27 : f32 to vector<8x1xf32>
    %93 = arith.divf %91, %92 : vector<8x1xf32>
    %94 = vector.broadcast %86 : vector<8x1xf32> to vector<8x32xf32>
    %95 = arith.subf %82, %94 : vector<8x32xf32>
    %cst_28 = arith.constant 9.99999974E-6 : f32
    %96 = vector.broadcast %cst_28 : f32 to vector<8x1xf32>
    %97 = arith.addf %93, %96 : vector<8x1xf32>
    %98 = math.rsqrt %97 : vector<8x1xf32>
    %99 = vector.broadcast %98 : vector<8x1xf32> to vector<8x32xf32>
    %100 = arith.mulf %95, %99 : vector<8x32xf32>
    %101 = vector.broadcast %9 : vector<1x32xf32> to vector<8x32xf32>
    %102 = arith.mulf %100, %101 : vector<8x32xf32>
    %103 = vector.broadcast %10 : vector<1x32xf32> to vector<8x32xf32>
    %104 = arith.addf %102, %103 : vector<8x32xf32>
    %c0_29 = arith.constant 0 : index
    %c0_30 = arith.constant 0 : index
    %105 = vector.load %arg6[%c0_29, %c0_30] : memref<32x128xf32, #tpu.memory_space<vmem>>, vector<32x128xf32>
    %cst_31 = arith.constant dense<0.000000e+00> : vector<8x128xf32>
    %106 = tpu.matmul %104, %105, %cst_31 {dimension_numbers = #tpu.dot_dimension_numbers<[1], [0], [0], [1], [0, 0, 1, 1], [], []>} : vector<8x32xf32>, vector<32x128xf32>, vector<8x128xf32> -> vector<8x128xf32>
    %107 = vector.broadcast %13 : vector<1x128xf32> to vector<8x128xf32>
    %108 = arith.addf %106, %107 : vector<8x128xf32>
    %cst_32 = arith.constant 0.000000e+00 : f32
    %109 = vector.broadcast %cst_32 : f32 to vector<8x128xf32>
    %110 = arith.maximumf %108, %109 : vector<8x128xf32>
    %c0_33 = arith.constant 0 : index
    %c0_34 = arith.constant 0 : index
    %111 = vector.load %arg7[%c0_33, %c0_34] : memref<128x32xf32, #tpu.memory_space<vmem>>, vector<128x32xf32>
    %cst_35 = arith.constant dense<0.000000e+00> : vector<8x32xf32>
    %112 = tpu.matmul %110, %111, %cst_35 {dimension_numbers = #tpu.dot_dimension_numbers<[1], [0], [0], [1], [0, 0, 1, 1], [], []>} : vector<8x128xf32>, vector<128x32xf32>, vector<8x32xf32> -> vector<8x32xf32>
    %113 = vector.broadcast %8 : vector<1x32xf32> to vector<8x32xf32>
    %114 = arith.addf %112, %113 : vector<8x32xf32>
    %115 = arith.addf %104, %114 : vector<8x32xf32>
    %cst_36 = arith.constant dense<0.000000e+00> : vector<8xf32>
    %116 = vector.multi_reduction <add>, %115, %cst_36 [1] : vector<8x32xf32> to vector<8xf32>
    %117 = vector.shape_cast %116 : vector<8xf32> to vector<8x1xf32>
    %cst_37 = arith.constant 3.200000e+01 : f32
    %118 = vector.broadcast %cst_37 : f32 to vector<8x1xf32>
    %119 = arith.divf %117, %118 : vector<8x1xf32>
    %120 = vector.broadcast %119 : vector<8x1xf32> to vector<8x32xf32>
    %121 = arith.subf %115, %120 : vector<8x32xf32>
    %122 = arith.mulf %121, %121 : vector<8x32xf32>
    %cst_38 = arith.constant dense<0.000000e+00> : vector<8xf32>
    %123 = vector.multi_reduction <add>, %122, %cst_38 [1] : vector<8x32xf32> to vector<8xf32>
    %124 = vector.shape_cast %123 : vector<8xf32> to vector<8x1xf32>
    %cst_39 = arith.constant 3.200000e+01 : f32
    %125 = vector.broadcast %cst_39 : f32 to vector<8x1xf32>
    %126 = arith.divf %124, %125 : vector<8x1xf32>
    %127 = vector.broadcast %119 : vector<8x1xf32> to vector<8x32xf32>
    %128 = arith.subf %115, %127 : vector<8x32xf32>
    %cst_40 = arith.constant 9.99999974E-6 : f32
    %129 = vector.broadcast %cst_40 : f32 to vector<8x1xf32>
    %130 = arith.addf %126, %129 : vector<8x1xf32>
    %131 = math.rsqrt %130 : vector<8x1xf32>
    %132 = vector.broadcast %131 : vector<8x1xf32> to vector<8x32xf32>
    %133 = arith.mulf %128, %132 : vector<8x32xf32>
    %134 = vector.broadcast %11 : vector<1x32xf32> to vector<8x32xf32>
    %135 = arith.mulf %133, %134 : vector<8x32xf32>
    %136 = vector.broadcast %12 : vector<1x32xf32> to vector<8x32xf32>
    %137 = arith.addf %135, %136 : vector<8x32xf32>
    %c0_41 = arith.constant 0 : index
    %c0_42 = arith.constant 0 : index
    %138 = vector.load %arg9[%c0_41, %c0_42] : memref<8x32xf32, #tpu.memory_space<vmem>>, vector<8x32xf32>
    tpu.vector_store %arg9[%c0_41, %c0_42], %137 {strides = array<i32>} : memref<8x32xf32, #tpu.memory_space<vmem>>, vector<8x32xf32>,
    return
  }
  func.func @transform_0(%arg0: i32) -> (i32, i32) {
    %c0_i32 = arith.constant 0 : i32
    %c0_i32_0 = arith.constant 0 : i32
    return %arg0, %c0_i32 : i32, i32
  }
  func.func @transform_1(%arg0: i32) -> (i32, i32) {
    %c0_i32 = arith.constant 0 : i32
    %c0_i32_0 = arith.constant 0 : i32
    return %arg0, %c0_i32 : i32, i32
  }
  func.func @transform_2(%arg0: i32) -> (i32, i32) {
    %c0_i32 = arith.constant 0 : i32
    %c0_i32_0 = arith.constant 0 : i32
    return %arg0, %c0_i32 : i32, i32
  }
  func.func @transform_3(%arg0: i32) -> (i32, i32, i32) {
    %c0_i32 = arith.constant 0 : i32
    %c0_i32_0 = arith.constant 0 : i32
    %c0_i32_1 = arith.constant 0 : i32
    %c0_i32_2 = arith.constant 0 : i32
    return %c0_i32, %c0_i32_0, %c0_i32_1 : i32, i32, i32
  }
  func.func @transform_4(%arg0: i32) -> (i32, i32) {
    %c0_i32 = arith.constant 0 : i32
    %c0_i32_0 = arith.constant 0 : i32
    %c0_i32_1 = arith.constant 0 : i32
    return %c0_i32, %c0_i32_0 : i32, i32
  }
  func.func @transform_5(%arg0: i32) -> (i32, i32) {
    %c0_i32 = arith.constant 0 : i32
    %c0_i32_0 = arith.constant 0 : i32
    %c0_i32_1 = arith.constant 0 : i32
    return %c0_i32, %c0_i32_0 : i32, i32
  }
  func.func @transform_6(%arg0: i32) -> (i32, i32) {
    %c0_i32 = arith.constant 0 : i32
    %c0_i32_0 = arith.constant 0 : i32
    %c0_i32_1 = arith.constant 0 : i32
    return %c0_i32, %c0_i32_0 : i32, i32
  }
  func.func @transform_7(%arg0: i32) -> (i32, i32) {
    %c0_i32 = arith.constant 0 : i32
    %c0_i32_0 = arith.constant 0 : i32
    %c0_i32_1 = arith.constant 0 : i32
    return %c0_i32, %c0_i32_0 : i32, i32
  }
  func.func @transform_8(%arg0: i32) -> (i32, i32) {
    %c0_i32 = arith.constant 0 : i32
    %c0_i32_0 = arith.constant 0 : i32
    return %arg0, %c0_i32 : i32, i32
  }
}

</mosaic_0001>

<llo_original>
// kernel: tpu_custom_call.1
$region0: #{tpu_custom_call.1}
  #allocation0 [shape = 'u32[]', space=smem, size = 0x4, offset = 0x4, fixed_abs, tag = 'smem constant byte address 0x4 - core index']
  #allocation1 [shape = 'u32[144,128]{1,0:T(1,128)}', space=vmem, size = 0x12000, scoped, tag = 'internal scratch']
  %s0 = inlined_call_operand.hbm [shape: f32[16,32], index: 0, kind: input, shape index: {}]
  %s1 = inlined_call_operand.hbm [shape: f32[16,32], index: 1, kind: input, shape index: {}]
  %s2 = inlined_call_operand.hbm [shape: f32[16,32], index: 2, kind: input, shape index: {}]
  %s3 = inlined_call_operand.vmem [shape: f32[3,32,32], index: 3, kind: input, shape index: {}]
  %s4 = inlined_call_operand.vmem [shape: f32[32,32], index: 4, kind: input, shape index: {}]
  %s5 = inlined_call_operand.vmem [shape: f32[32,128], index: 5, kind: input, shape index: {}]
  %s6 = inlined_call_operand.vmem [shape: f32[128,32], index: 6, kind: input, shape index: {}]
  %s7 = inlined_call_operand.vmem [shape: f32[10,128], index: 7, kind: input, shape index: {}]
  %s8 = inlined_call_operand.hbm [shape: f32[16,32], index: 8, kind: output, shape index: {}]
  %s9 = sld [smem:[#allocation0]]
  $region77: #{tpu_custom_call.1} parent=0
    _
  %s11 = ssub.s32 1, %s9
  %s12 = scalar_select 0, %s11, %s9
  $region1: #{tpu_custom_call.1} parent=0
    #allocation2 [shape = 'u8[8192]{0}', space=vmem, size = 0x2000, scoped, tag = 'input window, operand 0']
    #allocation3 [shape = 's32[2]{0}', space=sflag, size = 0x8, scoped, tag = 'scoped memory for tpu_custom_call.1']
    #allocation4 [shape = 's32[2]{0}', space=sflag, size = 0x8, scoped, tag = 'scoped memory for tpu_custom_call.1']
    #allocation5 [shape = 'u8[8192]{0}', space=vmem, size = 0x2000, scoped, tag = 'input window, operand 1']
    #allocation6 [shape = 's32[2]{0}', space=sflag, size = 0x8, scoped, tag = 'scoped memory for tpu_custom_call.1']
    #allocation7 [shape = 'u8[8192]{0}', space=vmem, size = 0x2000, scoped, tag = 'input window, operand 2']
    #allocation8 [shape = 'u8[8192]{0}', space=vmem, size = 0x2000, scoped, tag = 'output window, operand 0']
    %13 = vsyncpa [#allocation3], 0
    %s14 = scalar_lea.sflag [#allocation3], 1
    %15 = vsyncpa %s14, 0
    %16 = vsyncpa [#allocation6], 0
    %s17 = scalar_lea.sflag [#allocation6], 1
    %18 = vsyncpa %s17, 0
    %19 = vsyncpa [#allocation4], 0
    %s20 = scalar_lea.sflag [#allocation4], 1
    %21 = vsyncpa %s20, 0
    loop: start=0, step=1, limit=4
    $region2: #{tpu_custom_call.1} parent=1 // loop_pre_header
      _
    $region3: #{tpu_custom_call.1} parent=1 // loop_header
      %s23 = sphi 0, %s27
      %p24 = scmp.ge.s32.totalorder %s23, 4
      %s33 = sphi 0, %s35
      %s36 = sphi 0, %s33
      %s37 = sphi 0, %s36
      %s53 = sphi 0, %s37
      %s59 = sphi 0, %s61
      %s62 = sphi 0, %s59
      %s63 = sphi 0, %s62
      %s79 = sphi 0, %s63
      %s85 = sphi 0, %s87
      %s88 = sphi 0, %s85
      %s89 = sphi 0, %s88
      %s105 = sphi 0, %s89
      %s109 = sphi 0, %s109
      %s111 = sphi 0, %s109
      %s112 = sphi 0, %s111
      %s126 = sphi 0, %s112
      %s130 = sphi 0, %s130
      %s132 = sphi 0, %s130
      %s133 = sphi 0, %s132
      %s147 = sphi 0, %s133
      %s151 = sphi 0, %s151
      %s153 = sphi 0, %s151
      %s154 = sphi 0, %s153
      %s168 = sphi 0, %s154
      %s172 = sphi 0, %s172
      %s174 = sphi 0, %s172
      %s175 = sphi 0, %s174
      %s189 = sphi 0, %s175
      %s193 = sphi 0, %s193
      %s195 = sphi 0, %s193
      %s196 = sphi 0, %s195
      %s210 = sphi 0, %s196
      %s216 = sphi 0, %s218
      %s219 = sphi 0, %s216
      %s220 = sphi 0, %s219
      %s236 = sphi 0, %s220
    $region4: #{tpu_custom_call.1} parent=1 // loop_header_branch
      %26 = sbr.rel (%p24) target = $region8
    $region5: #{tpu_custom_call.1} parent=1 // loop_body
      %s28 = ssub.s32 %s23, 1
      %s29 = ssub.s32 %s23, 2
      %s30 = sadd.s32 %s23, 1
      %s31 = ssub.s32 %s23, %s30
      %p32 = scmp.eq.s32.totalorder %s31, 0
      %s34 = sadd.s32 %s33, 1
      %s35 = scalar_select %p32, %s33, %s34
      %p38 = pneg %p32
      %p39 = scmp.eq.s32.totalorder %s23, 1
      %p40 = por %p38, %p39
      %p41 = scmp.ne.s32.totalorder %s33, %s36
      %p42 = scmp.eq.s32.totalorder %s23, 0
      %p43 = por %p41, %p42
      %p44 = scmp.ne.s32.totalorder %s33, %s36
      %p45 = scmp.eq.s32.totalorder %s28, 1
      %p46 = por %p44, %p45
      %p47 = scmp.ne.s32.totalorder %s36, %s37
      %p48 = scmp.eq.s32.totalorder %s28, 0
      %p49 = por %p47, %p48
      %p50 = scmp.ne.s32.totalorder %s36, %s37
      %p51 = scmp.eq.s32.totalorder %s29, 1
      %p52 = por %p50, %p51
      %p54 = scmp.ne.s32.totalorder %s37, %s53
      %p55 = scmp.eq.s32.totalorder %s29, 0
      %p56 = por %p54, %p55
      %s57 = ssub.s32 %s23, %s30
      %p58 = scmp.eq.s32.totalorder %s57, 0
      %s60 = sadd.s32 %s59, 1
      %s61 = scalar_select %p58, %s59, %s60
      %p64 = pneg %p58
      %p65 = scmp.eq.s32.totalorder %s23, 1
      %p66 = por %p64, %p65
      %p67 = scmp.ne.s32.totalorder %s59, %s62
      %p68 = scmp.eq.s32.totalorder %s23, 0
      %p69 = por %p67, %p68
      %p70 = scmp.ne.s32.totalorder %s59, %s62
      %p71 = scmp.eq.s32.totalorder %s28, 1
      %p72 = por %p70, %p71
      %p73 = scmp.ne.s32.totalorder %s62, %s63
      %p74 = scmp.eq.s32.totalorder %s28, 0
      %p75 = por %p73, %p74
      %p76 = scmp.ne.s32.totalorder %s62, %s63
      %p77 = scmp.eq.s32.totalorder %s29, 1
      %p78 = por %p76, %p77
      %p80 = scmp.ne.s32.totalorder %s63, %s79
      %p81 = scmp.eq.s32.totalorder %s29, 0
      %p82 = por %p80, %p81
      %s83 = ssub.s32 %s23, %s30
      %p84 = scmp.eq.s32.totalorder %s83, 0
      %s86 = sadd.s32 %s85, 1
      %s87 = scalar_select %p84, %s85, %s86
      %p90 = pneg %p84
      %p91 = scmp.eq.s32.totalorder %s23, 1
      %p92 = por %p90, %p91
      %p93 = scmp.ne.s32.totalorder %s85, %s88
      %p94 = scmp.eq.s32.totalorder %s23, 0
      %p95 = por %p93, %p94
      %p96 = scmp.ne.s32.totalorder %s85, %s88
      %p97 = scmp.eq.s32.totalorder %s28, 1
      %p98 = por %p96, %p97
      %p99 = scmp.ne.s32.totalorder %s88, %s89
      %p100 = scmp.eq.s32.totalorder %s28, 0
      %p101 = por %p99, %p100
      %p102 = scmp.ne.s32.totalorder %s88, %s89
      %p103 = scmp.eq.s32.totalorder %s29, 1
      %p104 = por %p102, %p103
      %p106 = scmp.ne.s32.totalorder %s89, %s105
      %p107 = scmp.eq.s32.totalorder %s29, 0
      %p108 = por %p106, %p107
      %s110 = sadd.s32 %s109, 1
      %p113 = scmp.eq.s32.totalorder %s23, 1
      %p114 = scmp.ne.s32.totalorder %s109, %s111
      %p115 = scmp.eq.s32.totalorder %s23, 0
      %p116 = por %p114, %p115
      %p117 = scmp.ne.s32.totalorder %s109, %s111
      %p118 = scmp.eq.s32.totalorder %s28, 1
      %p119 = por %p117, %p118
      %p120 = scmp.ne.s32.totalorder %s111, %s112
      %p121 = scmp.eq.s32.totalorder %s28, 0
      %p122 = por %p120, %p121
      %p123 = scmp.ne.s32.totalorder %s111, %s112
      %p124 = scmp.eq.s32.totalorder %s29, 1
      %p125 = por %p123, %p124
      %p127 = scmp.ne.s32.totalorder %s112, %s126
      %p128 = scmp.eq.s32.totalorder %s29, 0
      %p129 = por %p127, %p128
      %s131 = sadd.s32 %s130, 1
      %p134 = scmp.eq.s32.totalorder %s23, 1
      %p135 = scmp.ne.s32.totalorder %s130, %s132
      %p136 = scmp.eq.s32.totalorder %s23, 0
      %p137 = por %p135, %p136
      %p138 = scmp.ne.s32.totalorder %s130, %s132
      %p139 = scmp.eq.s32.totalorder %s28, 1
      %p140 = por %p138, %p139
      %p141 = scmp.ne.s32.totalorder %s132, %s133
      %p142 = scmp.eq.s32.totalorder %s28, 0
      %p143 = por %p141, %p142
      %p144 = scmp.ne.s32.totalorder %s132, %s133
      %p145 = scmp.eq.s32.totalorder %s29, 1
      %p146 = por %p144, %p145
      %p148 = scmp.ne.s32.totalorder %s133, %s147
      %p149 = scmp.eq.s32.totalorder %s29, 0
      %p150 = por %p148, %p149
      %s152 = sadd.s32 %s151, 1
      %p155 = scmp.eq.s32.totalorder %s23, 1
      %p156 = scmp.ne.s32.totalorder %s151, %s153
      %p157 = scmp.eq.s32.totalorder %s23, 0
      %p158 = por %p156, %p157
      %p159 = scmp.ne.s32.totalorder %s151, %s153
      %p160 = scmp.eq.s32.totalorder %s28, 1
      %p161 = por %p159, %p160
      %p162 = scmp.ne.s32.totalorder %s153, %s154
      %p163 = scmp.eq.s32.totalorder %s28, 0
      %p164 = por %p162, %p163
      %p165 = scmp.ne.s32.totalorder %s153, %s154
      %p166 = scmp.eq.s32.totalorder %s29, 1
      %p167 = por %p165, %p166
      %p169 = scmp.ne.s32.totalorder %s154, %s168
      %p170 = scmp.eq.s32.totalorder %s29, 0
      %p171 = por %p169, %p170
      %s173 = sadd.s32 %s172, 1
      %p176 = scmp.eq.s32.totalorder %s23, 1
      %p177 = scmp.ne.s32.totalorder %s172, %s174
      %p178 = scmp.eq.s32.totalorder %s23, 0
      %p179 = por %p177, %p178
      %p180 = scmp.ne.s32.totalorder %s172, %s174
      %p181 = scmp.eq.s32.totalorder %s28, 1
      %p182 = por %p180, %p181
      %p183 = scmp.ne.s32.totalorder %s174, %s175
      %p184 = scmp.eq.s32.totalorder %s28, 0
      %p185 = por %p183, %p184
      %p186 = scmp.ne.s32.totalorder %s174, %s175
      %p187 = scmp.eq.s32.totalorder %s29, 1
      %p188 = por %p186, %p187
      %p190 = scmp.ne.s32.totalorder %s175, %s189
      %p191 = scmp.eq.s32.totalorder %s29, 0
      %p192 = por %p190, %p191
      %s194 = sadd.s32 %s193, 1
      %p197 = scmp.eq.s32.totalorder %s23, 1
      %p198 = scmp.ne.s32.totalorder %s193, %s195
      %p199 = scmp.eq.s32.totalorder %s23, 0
      %p200 = por %p198, %p199
      %p201 = scmp.ne.s32.totalorder %s193, %s195
      %p202 = scmp.eq.s32.totalorder %s28, 1
      %p203 = por %p201, %p202
      %p204 = scmp.ne.s32.totalorder %s195, %s196
      %p205 = scmp.eq.s32.totalorder %s28, 0
      %p206 = por %p204, %p205
      %p207 = scmp.ne.s32.totalorder %s195, %s196
      %p208 = scmp.eq.s32.totalorder %s29, 1
      %p209 = por %p207, %p208
      %p211 = scmp.ne.s32.totalorder %s196, %s210
      %p212 = scmp.eq.s32.totalorder %s29, 0
      %p213 = por %p211, %p212
      %s214 = ssub.s32 %s23, %s30
      %p215 = scmp.eq.s32.totalorder %s214, 0
      %s217 = sadd.s32 %s216, 1
      %s218 = scalar_select %p215, %s216, %s217
      %p221 = pneg %p215
      %p222 = scmp.eq.s32.totalorder %s23, 1
      %p223 = por %p221, %p222
      %p224 = scmp.ne.s32.totalorder %s216, %s219
      %p225 = scmp.eq.s32.totalorder %s23, 0
      %p226 = por %p224, %p225
      %p227 = scmp.ne.s32.totalorder %s216, %s219
      %p228 = scmp.eq.s32.totalorder %s28, 1
      %p229 = por %p227, %p228
      %p230 = scmp.ne.s32.totalorder %s219, %s220
      %p231 = scmp.eq.s32.totalorder %s28, 0
      %p232 = por %p230, %p231
      %p233 = scmp.ne.s32.totalorder %s219, %s220
      %p234 = scmp.eq.s32.totalorder %s29, 1
      %p235 = por %p233, %p234
      %p237 = scmp.ne.s32.totalorder %s220, %s236
      %p238 = scmp.eq.s32.totalorder %s29, 0
      %p239 = por %p237, %p238
      %p240 = scmp.le.s32.totalorder 1, %s23
      %p241 = scmp.lt.s32.totalorder %s23, 3
      %p242 = pnand %p240, %p241
      %p243 = pneg %p242
      // Predicated region
      $region9: #{tpu_custom_call.1} parent=5 // pred_check
        _
      $region10: #{tpu_custom_call.1} parent=5 // pred_check_branch
        %245 = sbr.rel (%p242) target = $region12
      $region11: #{tpu_custom_call.1} parent=5 // pred_region
        %s246 = ssub.s32 %s23, 1
        // Predicated region
        $region13: #{tpu_custom_call.1} parent=11 // pred_check
          %p247 = pneg %p122
        $region14: #{tpu_custom_call.1} parent=11 // pred_check_branch
          %249 = sbr.rel (%p247) target = $region16
        $region15: #{tpu_custom_call.1} parent=11 // pred_region
          _
        $region16: #{tpu_custom_call.1} parent=11 // pred_fallthru
          _
        // Predicated region
        $region17: #{tpu_custom_call.1} parent=11 // pred_check
          %p250 = pneg %p143
        $region18: #{tpu_custom_call.1} parent=11 // pred_check_branch
          %252 = sbr.rel (%p250) target = $region20
        $region19: #{tpu_custom_call.1} parent=11 // pred_region
          _
        $region20: #{tpu_custom_call.1} parent=11 // pred_fallthru
          _
        // Predicated region
        $region21: #{tpu_custom_call.1} parent=11 // pred_check
          %p253 = pneg %p164
        $region22: #{tpu_custom_call.1} parent=11 // pred_check_branch
          %255 = sbr.rel (%p253) target = $region24
        $region23: #{tpu_custom_call.1} parent=11 // pred_region
          _
        $region24: #{tpu_custom_call.1} parent=11 // pred_fallthru
          _
        // Predicated region
        $region25: #{tpu_custom_call.1} parent=11 // pred_check
          %p256 = pneg %p185
        $region26: #{tpu_custom_call.1} parent=11 // pred_check_branch
          %258 = sbr.rel (%p256) target = $region28
        $region27: #{tpu_custom_call.1} parent=11 // pred_region
          _
        $region28: #{tpu_custom_call.1} parent=11 // pred_fallthru
          _
        // Predicated region
        $region29: #{tpu_custom_call.1} parent=11 // pred_check
          %p259 = pneg %p206
        $region30: #{tpu_custom_call.1} parent=11 // pred_check_branch
          %261 = sbr.rel (%p259) target = $region32
        $region31: #{tpu_custom_call.1} parent=11 // pred_region
          _
        $region32: #{tpu_custom_call.1} parent=11 // pred_fallthru
          _
      $region12: #{tpu_custom_call.1} parent=5 // pred_fallthru
        _
      %p262 = scmp.lt.s32.totalorder %s23, 2
      // Predicated region
      $region33: #{tpu_custom_call.1} parent=5 // pred_check
        %p263 = pneg %p262
      $region34: #{tpu_custom_call.1} parent=5 // pred_check_branch
        %265 = sbr.rel (%p263) target = $region36
      $region35: #{tpu_custom_call.1} parent=5 // pred_region
        // Predicated region
        $region37: #{tpu_custom_call.1} parent=35 // pred_check
          %p266 = pneg %p43
        $region38: #{tpu_custom_call.1} parent=35 // pred_check_branch
          %268 = sbr.rel (%p266) target = $region40
        $region39: #{tpu_custom_call.1} parent=35 // pred_region
          %s269 = sand.u32 %s33, 1
          %s270 = scalar_lea.sflag [#allocation3], %s269
          %s271 = sand.u32 %s33, 1
          %s272 = smul.addr %s271, 8
          %s273 = scalar_lea.vmem [#allocation2], %s272
          %s275 = ssub.s32 128, 128
          %276 = vsyncadd %s270, %s275
          %s277 = smul.addr %s23, 128
          %s278 = scalar_lea.hbm %s0, %s277
          %s280 = sshll.u32 %s273, 4
          %s281 = int_to_ptr.vmem [resolvable:$true] %s280
          %283 = dma.hbm_to_vmem [thread:$0]  %s278, 128, %s281, %s270
        $region40: #{tpu_custom_call.1} parent=35 // pred_fallthru
          _
        // Predicated region
        $region41: #{tpu_custom_call.1} parent=35 // pred_check
          %p284 = pneg %p69
        $region42: #{tpu_custom_call.1} parent=35 // pred_check_branch
          %286 = sbr.rel (%p284) target = $region44
        $region43: #{tpu_custom_call.1} parent=35 // pred_region
          %s287 = sand.u32 %s23, 1
          %s288 = scalar_lea.sflag [#allocation6], %s287
          %s289 = sand.u32 %s59, 1
          %s290 = smul.addr %s289, 8
          %s291 = scalar_lea.vmem [#allocation5], %s290
          %s293 = ssub.s32 128, 128
          %294 = vsyncadd %s288, %s293
          %s295 = smul.addr %s23, 128
          %s296 = scalar_lea.hbm %s1, %s295
          %s298 = sshll.u32 %s291, 4
          %s299 = int_to_ptr.vmem [resolvable:$true] %s298
          %301 = dma.hbm_to_vmem [thread:$0]  %s296, 128, %s299, %s288
        $region44: #{tpu_custom_call.1} parent=35 // pred_fallthru
          _
        // Predicated region
        $region45: #{tpu_custom_call.1} parent=35 // pred_check
          %p302 = pneg %p95
        $region46: #{tpu_custom_call.1} parent=35 // pred_check_branch
          %304 = sbr.rel (%p302) target = $region48
        $region47: #{tpu_custom_call.1} parent=35 // pred_region
          %s305 = sand.u32 %s23, 1
          %s306 = scalar_lea.sflag [#allocation6], %s305
          %s307 = sand.u32 %s85, 1
          %s308 = smul.addr %s307, 8
          %s309 = scalar_lea.vmem [#allocation7], %s308
          %s311 = ssub.s32 128, 128
          %312 = vsyncadd %s306, %s311
          %s313 = smul.addr %s23, 128
          %s314 = scalar_lea.hbm %s2, %s313
          %s316 = sshll.u32 %s309, 4
          %s317 = int_to_ptr.vmem [resolvable:$true] %s316
          %319 = dma.hbm_to_vmem [thread:$0]  %s314, 128, %s317, %s306
        $region48: #{tpu_custom_call.1} parent=35 // pred_fallthru
          _
      $region36: #{tpu_custom_call.1} parent=5 // pred_fallthru
        _
      %p320 = scmp.le.s32.totalorder 1, %s23
      %p321 = scmp.lt.s32.totalorder %s23, 3
      %p322 = pnand %p320, %p321
      %p323 = pneg %p322
      // Predicated region
      $region49: #{tpu_custom_call.1} parent=5 // pred_check
        _
      $region50: #{tpu_custom_call.1} parent=5 // pred_check_branch
        %325 = sbr.rel (%p322) target = $region52
      $region51: #{tpu_custom_call.1} parent=5 // pred_region
        %s326 = ssub.s32 %s23, 1
        %s327 = sand.u32 %s36, 1
        %s328 = scalar_lea.sflag [#allocation3], %s327
        %s329 = sand.u32 %s36, 1
        %s330 = smul.addr %s329, 8
        %s331 = scalar_lea.vmem [#allocation2], %s330
        // Predicated region
        $region53: #{tpu_custom_call.1} parent=51 // pred_check
          %p332 = pneg %p49
        $region54: #{tpu_custom_call.1} parent=51 // pred_check_branch
          %334 = sbr.rel (%p332) target = $region56
        $region55: #{tpu_custom_call.1} parent=51 // pred_region
          %335 = dma.done %s328, 128
        $region56: #{tpu_custom_call.1} parent=51 // pred_fallthru
          _
        %s336 = sand.u32 %s28, 1
        %s337 = scalar_lea.sflag [#allocation6], %s336
        %s338 = sand.u32 %s62, 1
        %s339 = smul.addr %s338, 8
        %s340 = scalar_lea.vmem [#allocation5], %s339
        // Predicated region
        $region57: #{tpu_custom_call.1} parent=51 // pred_check
          %p341 = pneg %p75
        $region58: #{tpu_custom_call.1} parent=51 // pred_check_branch
          %343 = sbr.rel (%p341) target = $region60
        $region59: #{tpu_custom_call.1} parent=51 // pred_region
          %344 = dma.done %s337, 128
        $region60: #{tpu_custom_call.1} parent=51 // pred_fallthru
          _
        %s345 = sand.u32 %s28, 1
        %s346 = scalar_lea.sflag [#allocation6], %s345
        %s347 = sand.u32 %s88, 1
        %s348 = smul.addr %s347, 8
        %s349 = scalar_lea.vmem [#allocation7], %s348
        // Predicated region
        $region61: #{tpu_custom_call.1} parent=51 // pred_check
          %p350 = pneg %p101
        $region62: #{tpu_custom_call.1} parent=51 // pred_check_branch
          %352 = sbr.rel (%p350) target = $region64
        $region63: #{tpu_custom_call.1} parent=51 // pred_region
          %353 = dma.done %s346, 128
        $region64: #{tpu_custom_call.1} parent=51 // pred_fallthru
          _
        %s354 = sand.u32 %s36, 1
        %s355 = scalar_lea.sflag [#allocation3], %s354
        %s356 = sand.u32 %s36, 1
        %s357 = smul.addr %s356, 8
        %s358 = scalar_lea.vmem [#allocation2], %s357
        %p359 = pneg %p49
        %p360 = pneg %p46
        %s361 = sand.u32 %s28, 1
        %s362 = scalar_lea.sflag [#allocation6], %s361
        %s363 = sand.u32 %s62, 1
        %s364 = smul.addr %s363, 8
        %s365 = scalar_lea.vmem [#allocation5], %s364
        %p366 = pneg %p75
        %p367 = pneg %p72
        %s368 = sand.u32 %s28, 1
        %s369 = scalar_lea.sflag [#allocation6], %s368
        %s370 = sand.u32 %s88, 1
        %s371 = smul.addr %s370, 8
        %s372 = scalar_lea.vmem [#allocation7], %s371
        %p373 = pneg %p101
        %p374 = pneg %p98
        %p375 = pneg %p122
        %p376 = pneg %p119
        %p377 = pneg %p143
        %p378 = pneg %p140
        %p379 = pneg %p164
        %p380 = pneg %p161
        %p381 = pneg %p185
        %p382 = pneg %p182
        %p383 = pneg %p206
        %p384 = pneg %p203
        %p385 = pneg %p232
        %p386 = pneg %p229
        %s387 = sand.u32 %s219, 1
        %s388 = scalar_lea.sflag [#allocation4], %s387
        %s389 = sand.u32 %s219, 1
        %s390 = smul.addr %s389, 8
        %s391 = scalar_lea.vmem [#allocation8], %s390
        %v392 = vld [vmem:[%s331] sm:$0xff]
        %v393 = vld [vmem:[%s340] sm:$0xff]
        %v394 = vld [vmem:[%s349] sm:$0xff]
        %v395 = vld [vmem:[%s7] sm:$0xff]
        %v396 = vld [vmem:[%s7 + $0x8] sm:$0x3]
        %v397 = vld [vmem:[%s3] sm:$0xff]
        %v398 = vld [vmem:[%s3 + $0x8] sm:$0xff]
        %v399 = vld [vmem:[%s3 + $0x10] sm:$0xff]
        %v400 = vld [vmem:[%s3 + $0x18] sm:$0xff]
        %v401 = vlaneseq
        %v402 = vshrl.u32 %v401, 7
        %v403 = vsub.s32 0, %v402
        %v404 = vrot.slane %v395, %v403
        %vm405 = vcmask 261120
        %v407 = vsel %vm405, %v392, 0
        %409 = vmatprep.subr.mxu0 0.0
        %410 = vmatpush1.msra.mxu0 %v397
        %411 = vmatprep.subr.mxu0 0.0
        %412 = vmatpush1.msra.mxu0 %v398
        %413 = vmatprep.subr.mxu0 0.0
        %414 = vmatpush1.msra.mxu0 %v399
        %415 = vmatprep.subr.mxu0 0.0
        %416 = vmatpush1.msra.mxu0 %v400
        %417 = vmatprep.subr.mxu0 0.0
        %418 = vmatpush1.msra.mxu0 0.0
        %419 = vmatprep.subr.mxu0 0.0
        %420 = vmatpush1.msra.mxu0 0.0
        %421 = vmatprep.subr.mxu0 0.0
        %422 = vmatpush1.msra.mxu0 0.0
        %423 = vmatprep.subr.mxu0 0.0
        %424 = vmatpush1.msra.mxu0 0.0
        %425 = vmatprep.subr.mxu0 0.0
        %426 = vmatpush1.msra.mxu0 0.0
        %427 = vmatprep.subr.mxu0 0.0
        %428 = vmatpush1.msra.mxu0 0.0
        %429 = vmatprep.subr.mxu0 0.0
        %430 = vmatpush1.msra.mxu0 0.0
        %431 = vmatprep.subr.mxu0 0.0
        %432 = vmatpush1.msra.mxu0 0.0
        %433 = vmatprep.subr.mxu0 0.0
        %434 = vmatpush1.msra.mxu0 0.0
        %435 = vmatprep.subr.mxu0 0.0
        %436 = vmatpush1.msra.mxu0 0.0
        %437 = vmatprep.subr.mxu0 0.0
        %438 = vmatpush1.msra.mxu0 0.0
        %439 = vmatprep.subr.mxu0 0.0
        %440 = vmatpush1.msra.mxu0 0.0
        %441 = vmatprep.subr.mxu0 0.0
        %442 = vmatpush1.msra.mxu0 0.0
        %443 = vmatprep.subr.mxu0 0.0
        %444 = vmatpush1.msra.mxu0 0.0
        %445 = vmatprep.subr.mxu0 0.0
        %446 = vmatpush1.msra.mxu0 0.0
        %447 = vmatprep.subr.mxu0 0.0
        %448 = vmatpush1.msra.mxu0 0.0
        %449 = vmatprep.subr.mxu0 0.0
        %450 = vmatpush1.msra.mxu0 0.0
        %451 = vmatprep.subr.mxu0 0.0
        %452 = vmatpush1.msra.mxu0 0.0
        %453 = vmatprep.subr.mxu0 0.0
        %454 = vmatpush1.msra.mxu0 0.0
        %455 = vmatprep.subr.mxu0 0.0
        %456 = vmatpush1.msra.mxu0 0.0
        %457 = vmatprep.subr.mxu0 0.0
        %458 = vmatpush1.msra.mxu0 0.0
        %459 = vmatprep.subr.mxu0 0.0
        %460 = vmatpush1.msra.mxu0 0.0
        %461 = vmatprep.subr.mxu0 0.0
        %462 = vmatpush1.msra.mxu0 0.0
        %463 = vmatprep.subr.mxu0 0.0
        %464 = vmatpush1.msra.mxu0 0.0
        %465 = vmatprep.subr.mxu0 0.0
        %466 = vmatpush1.msra.mxu0 0.0
        %467 = vmatprep.subr.mxu0 0.0
        %468 = vmatpush1.msra.mxu0 0.0
        %469 = vmatprep.subr.mxu0 0.0
        %470 = vmatpush1.msra.mxu0 0.0
        %471 = vmatprep.subr.mxu0 0.0
        %472 = vmatpush1.msra.mxu0 0.0
        %473 = vmatprep.mubr.f32.mxu0 0.0
        %474 = vmatmul.mubr.f32.gmra.mrb[0].mxu0 %v407
        %v475 = vpop.f32.mrb[0].mxu0
        %v476 = vadd.f32 %v404, %v475
        %v477 = vpop.f32.mrb[0].mxu0
        %478 = vdwg.mxu0
        %v479 = vmul.f32 %v476, 0.35355338
        %s480 = scalar_lea.vmem %s3, 32
        %v481 = vld [vmem:[%s480] sm:$0xff]
        %v482 = vld [vmem:[%s480 + $0x8] sm:$0xff]
        %v483 = vld [vmem:[%s480 + $0x10] sm:$0xff]
        %v484 = vld [vmem:[%s480 + $0x18] sm:$0xff]
        %v485 = vlaneseq
        %v486 = vshrl.u32 %v485, 7
        %v487 = vsub.s32 1, %v486
        %v488 = vrot.slane %v395, %v487
        %v490 = vsel %vm405, %v393, 0
        %492 = vmatprep.subr.mxu0 0.0
        %493 = vmatpush1.msra.mxu0 %v481
        %494 = vmatprep.subr.mxu0 0.0
        %495 = vmatpush1.msra.mxu0 %v482
        %496 = vmatprep.subr.mxu0 0.0
        %497 = vmatpush1.msra.mxu0 %v483
        %498 = vmatprep.subr.mxu0 0.0
        %499 = vmatpush1.msra.mxu0 %v484
        %500 = vmatprep.subr.mxu0 0.0
        %501 = vmatpush1.msra.mxu0 0.0
        %502 = vmatprep.subr.mxu0 0.0
        %503 = vmatpush1.msra.mxu0 0.0
        %504 = vmatprep.subr.mxu0 0.0
        %505 = vmatpush1.msra.mxu0 0.0
        %506 = vmatprep.subr.mxu0 0.0
        %507 = vmatpush1.msra.mxu0 0.0
        %508 = vmatprep.subr.mxu0 0.0
        %509 = vmatpush1.msra.mxu0 0.0
        %510 = vmatprep.subr.mxu0 0.0
        %511 = vmatpush1.msra.mxu0 0.0
        %512 = vmatprep.subr.mxu0 0.0
        %513 = vmatpush1.msra.mxu0 0.0
        %514 = vmatprep.subr.mxu0 0.0
        %515 = vmatpush1.msra.mxu0 0.0
        %516 = vmatprep.subr.mxu0 0.0
        %517 = vmatpush1.msra.mxu0 0.0
        %518 = vmatprep.subr.mxu0 0.0
        %519 = vmatpush1.msra.mxu0 0.0
        %520 = vmatprep.subr.mxu0 0.0
        %521 = vmatpush1.msra.mxu0 0.0
        %522 = vmatprep.subr.mxu0 0.0
        %523 = vmatpush1.msra.mxu0 0.0
        %524 = vmatprep.subr.mxu0 0.0
        %525 = vmatpush1.msra.mxu0 0.0
        %526 = vmatprep.subr.mxu0 0.0
        %527 = vmatpush1.msra.mxu0 0.0
        %528 = vmatprep.subr.mxu0 0.0
        %529 = vmatpush1.msra.mxu0 0.0
        %530 = vmatprep.subr.mxu0 0.0
        %531 = vmatpush1.msra.mxu0 0.0
        %532 = vmatprep.subr.mxu0 0.0
        %533 = vmatpush1.msra.mxu0 0.0
        %534 = vmatprep.subr.mxu0 0.0
        %535 = vmatpush1.msra.mxu0 0.0
        %536 = vmatprep.subr.mxu0 0.0
        %537 = vmatpush1.msra.mxu0 0.0
        %538 = vmatprep.subr.mxu0 0.0
        %539 = vmatpush1.msra.mxu0 0.0
        %540 = vmatprep.subr.mxu0 0.0
        %541 = vmatpush1.msra.mxu0 0.0
        %542 = vmatprep.subr.mxu0 0.0
        %543 = vmatpush1.msra.mxu0 0.0
        %544 = vmatprep.subr.mxu0 0.0
        %545 = vmatpush1.msra.mxu0 0.0
        %546 = vmatprep.subr.mxu0 0.0
        %547 = vmatpush1.msra.mxu0 0.0
        %548 = vmatprep.subr.mxu0 0.0
        %549 = vmatpush1.msra.mxu0 0.0
        %550 = vmatprep.subr.mxu0 0.0
        %551 = vmatpush1.msra.mxu0 0.0
        %552 = vmatprep.subr.mxu0 0.0
        %553 = vmatpush1.msra.mxu0 0.0
        %554 = vmatprep.subr.mxu0 0.0
        %555 = vmatpush1.msra.mxu0 0.0
        %556 = vmatprep.mubr.f32.mxu0 0.0
        %557 = vmatmul.mubr.f32.gmra.mrb[0].mxu0 %v490
        %v558 = vpop.f32.mrb[0].mxu0
        %v559 = vadd.f32 %v488, %v558
        %v560 = vpop.f32.mrb[0].mxu0
        %561 = vdwg.mxu0
        %s562 = scalar_lea.vmem %s3, 64
        %v563 = vld [vmem:[%s562] sm:$0xff]
        %v564 = vld [vmem:[%s562 + $0x8] sm:$0xff]
        %v565 = vld [vmem:[%s562 + $0x10] sm:$0xff]
        %v566 = vld [vmem:[%s562 + $0x18] sm:$0xff]
        %v567 = vlaneseq
        %v568 = vshrl.u32 %v567, 7
        %v569 = vsub.s32 2, %v568
        %v570 = vrot.slane %v395, %v569
        %v572 = vsel %vm405, %v394, 0
        %574 = vmatprep.subr.mxu0 0.0
        %575 = vmatpush1.msra.mxu0 %v563
        %576 = vmatprep.subr.mxu0 0.0
        %577 = vmatpush1.msra.mxu0 %v564
        %578 = vmatprep.subr.mxu0 0.0
        %579 = vmatpush1.msra.mxu0 %v565
        %580 = vmatprep.subr.mxu0 0.0
        %581 = vmatpush1.msra.mxu0 %v566
        %582 = vmatprep.subr.mxu0 0.0
        %583 = vmatpush1.msra.mxu0 0.0
        %584 = vmatprep.subr.mxu0 0.0
        %585 = vmatpush1.msra.mxu0 0.0
        %586 = vmatprep.subr.mxu0 0.0
        %587 = vmatpush1.msra.mxu0 0.0
        %588 = vmatprep.subr.mxu0 0.0
        %589 = vmatpush1.msra.mxu0 0.0
        %590 = vmatprep.subr.mxu0 0.0
        %591 = vmatpush1.msra.mxu0 0.0
        %592 = vmatprep.subr.mxu0 0.0
        %593 = vmatpush1.msra.mxu0 0.0
        %594 = vmatprep.subr.mxu0 0.0
        %595 = vmatpush1.msra.mxu0 0.0
        %596 = vmatprep.subr.mxu0 0.0
        %597 = vmatpush1.msra.mxu0 0.0
        %598 = vmatprep.subr.mxu0 0.0
        %599 = vmatpush1.msra.mxu0 0.0
        %600 = vmatprep.subr.mxu0 0.0
        %601 = vmatpush1.msra.mxu0 0.0
        %602 = vmatprep.subr.mxu0 0.0
        %603 = vmatpush1.msra.mxu0 0.0
        %604 = vmatprep.subr.mxu0 0.0
        %605 = vmatpush1.msra.mxu0 0.0
        %606 = vmatprep.subr.mxu0 0.0
        %607 = vmatpush1.msra.mxu0 0.0
        %608 = vmatprep.subr.mxu0 0.0
        %609 = vmatpush1.msra.mxu0 0.0
        %610 = vmatprep.subr.mxu0 0.0
        %611 = vmatpush1.msra.mxu0 0.0
        %612 = vmatprep.subr.mxu0 0.0
        %613 = vmatpush1.msra.mxu0 0.0
        %614 = vmatprep.subr.mxu0 0.0
        %615 = vmatpush1.msra.mxu0 0.0
        %616 = vmatprep.subr.mxu0 0.0
        %617 = vmatpush1.msra.mxu0 0.0
        %618 = vmatprep.subr.mxu0 0.0
        %619 = vmatpush1.msra.mxu0 0.0
        %620 = vmatprep.subr.mxu0 0.0
        %621 = vmatpush1.msra.mxu0 0.0
        %622 = vmatprep.subr.mxu0 0.0
        %623 = vmatpush1.msra.mxu0 0.0
        %624 = vmatprep.subr.mxu0 0.0
        %625 = vmatpush1.msra.mxu0 0.0
        %626 = vmatprep.subr.mxu0 0.0
        %627 = vmatpush1.msra.mxu0 0.0
        %628 = vmatprep.subr.mxu0 0.0
        %629 = vmatpush1.msra.mxu0 0.0
        %630 = vmatprep.subr.mxu0 0.0
        %631 = vmatpush1.msra.mxu0 0.0
        %632 = vmatprep.subr.mxu0 0.0
        %633 = vmatpush1.msra.mxu0 0.0
        %634 = vmatprep.subr.mxu0 0.0
        %635 = vmatpush1.msra.mxu0 0.0
        %636 = vmatprep.subr.mxu0 0.0
        %637 = vmatpush1.msra.mxu0 0.0
        %638 = vmatprep.mubr.f32.mxu0 0.0
        %639 = vmatmul.mubr.f32.gmra.mrb[0].mxu0 %v572
        %v640 = vpop.f32.mrb[0].mxu0
        %v641 = vadd.f32 %v570, %v640
        %v642 = vpop.f32.mrb[0].mxu0
        %643 = vdwg.mxu0
        %645 = vrot.lane.b32.xlu0 %v479, 120
        %v646 = vpop.permute.xlu0 %645
        %647 = vrot.lane.b32.xlu0 %v479, 112
        %v648 = vpop.permute.xlu0 %647
        %649 = vrot.lane.b32.xlu0 %v479, 104
        %v650 = vpop.permute.xlu0 %649
        %652 = vrot.lane.b32.xlu0 %v559, 120
        %v653 = vpop.permute.xlu0 %652
        %654 = vrot.lane.b32.xlu0 %v559, 112
        %v655 = vpop.permute.xlu0 %654
        %656 = vrot.lane.b32.xlu0 %v559, 104
        %v657 = vpop.permute.xlu0 %656
        %659 = vrot.lane.b32.xlu0 %v641, 120
        %v660 = vpop.permute.xlu0 %659
        %662 = vrot.lane.b32.xlu0 %v641, 112
        %v663 = vpop.permute.xlu0 %662
        %665 = vrot.lane.b32.xlu0 %v641, 104
        %v666 = vpop.permute.xlu0 %665
        %vm668 = vcmask 64512
        %v669 = vsel %vm668, %v479, 0
        %v671 = vsel %vm668, %v559, 0
        %673 = vmatprep.subr.mxu0 0.0
        %674 = vmatpush1.xpose.msra.mxu0 %v671
        %675 = vmatprep.subr.mxu0 0.0
        %676 = vmatpush1.xpose.msra.mxu0 0.0
        %677 = vmatprep.subr.mxu0 0.0
        %678 = vmatpush1.xpose.msra.mxu0 0.0
        %679 = vmatprep.subr.mxu0 0.0
        %680 = vmatpush1.xpose.msra.mxu0 0.0
        %681 = vmatprep.subr.mxu0 0.0
        %682 = vmatpush1.xpose.msra.mxu0 0.0
        %683 = vmatprep.subr.mxu0 0.0
        %684 = vmatpush1.xpose.msra.mxu0 0.0
        %685 = vmatprep.subr.mxu0 0.0
        %686 = vmatpush1.xpose.msra.mxu0 0.0
        %687 = vmatprep.subr.mxu0 0.0
        %688 = vmatpush1.xpose.msra.mxu0 0.0
        %689 = vmatprep.subr.mxu0 0.0
        %690 = vmatpush1.xpose.msra.mxu0 0.0
        %691 = vmatprep.subr.mxu0 0.0
        %692 = vmatpush1.xpose.msra.mxu0 0.0
        %693 = vmatprep.subr.mxu0 0.0
        %694 = vmatpush1.xpose.msra.mxu0 0.0
        %695 = vmatprep.subr.mxu0 0.0
        %696 = vmatpush1.xpose.msra.mxu0 0.0
        %697 = vmatprep.subr.mxu0 0.0
        %698 = vmatpush1.xpose.msra.mxu0 0.0
        %699 = vmatprep.subr.mxu0 0.0
        %700 = vmatpush1.xpose.msra.mxu0 0.0
        %701 = vmatprep.subr.mxu0 0.0
        %702 = vmatpush1.xpose.msra.mxu0 0.0
        %703 = vmatprep.subr.mxu0 0.0
        %704 = vmatpush1.xpose.msra.mxu0 0.0
        %705 = vmatprep.subr.mxu0 0.0
        %706 = vmatpush1.xpose.msra.mxu0 0.0
        %707 = vmatprep.subr.mxu0 0.0
        %708 = vmatpush1.xpose.msra.mxu0 0.0
        %709 = vmatprep.subr.mxu0 0.0
        %710 = vmatpush1.xpose.msra.mxu0 0.0
        %711 = vmatprep.subr.mxu0 0.0
        %712 = vmatpush1.xpose.msra.mxu0 0.0
        %713 = vmatprep.subr.mxu0 0.0
        %714 = vmatpush1.xpose.msra.mxu0 0.0
        %715 = vmatprep.subr.mxu0 0.0
        %716 = vmatpush1.xpose.msra.mxu0 0.0
        %717 = vmatprep.subr.mxu0 0.0
        %718 = vmatpush1.xpose.msra.mxu0 0.0
        %719 = vmatprep.subr.mxu0 0.0
        %720 = vmatpush1.xpose.msra.mxu0 0.0
        %721 = vmatprep.subr.mxu0 0.0
        %722 = vmatpush1.xpose.msra.mxu0 0.0
        %723 = vmatprep.subr.mxu0 0.0
        %724 = vmatpush1.xpose.msra.mxu0 0.0
        %725 = vmatprep.subr.mxu0 0.0
        %726 = vmatpush1.xpose.msra.mxu0 0.0
        %727 = vmatprep.subr.mxu0 0.0
        %728 = vmatpush1.xpose.msra.mxu0 0.0
        %729 = vmatprep.subr.mxu0 0.0
        %730 = vmatpush1.xpose.msra.mxu0 0.0
        %731 = vmatprep.subr.mxu0 0.0
        %732 = vmatpush1.xpose.msra.mxu0 0.0
        %733 = vmatprep.subr.mxu0 0.0
        %734 = vmatpush1.xpose.msra.mxu0 0.0
        %735 = vmatprep.subr.mxu0 0.0
        %736 = vmatpush1.xpose.msra.mxu0 0.0
        %737 = vmatprep.mubr.f32.mxu0 0.0
        %738 = vmatmul.mubr.f32.gmra.mrb[0].mxu0 %v669
        %v739 = vpop.f32.mrb[0].mxu0
        %v740 = vadd.f32 0.0, %v739
        %v741 = vpop.f32.mrb[0].mxu0
        %742 = vdwg.mxu0
        %v743 = vsel %vm668, %v646, 0
        %v745 = vsel %vm668, %v653, 0
        %747 = vmatprep.subr.mxu0 0.0
        %748 = vmatpush1.xpose.msra.mxu0 %v745
        %749 = vmatprep.subr.mxu0 0.0
        %750 = vmatpush1.xpose.msra.mxu0 0.0
        %751 = vmatprep.subr.mxu0 0.0
        %752 = vmatpush1.xpose.msra.mxu0 0.0
        %753 = vmatprep.subr.mxu0 0.0
        %754 = vmatpush1.xpose.msra.mxu0 0.0
        %755 = vmatprep.subr.mxu0 0.0
        %756 = vmatpush1.xpose.msra.mxu0 0.0
        %757 = vmatprep.subr.mxu0 0.0
        %758 = vmatpush1.xpose.msra.mxu0 0.0
        %759 = vmatprep.subr.mxu0 0.0
        %760 = vmatpush1.xpose.msra.mxu0 0.0
        %761 = vmatprep.subr.mxu0 0.0
        %762 = vmatpush1.xpose.msra.mxu0 0.0
        %763 = vmatprep.subr.mxu0 0.0
        %764 = vmatpush1.xpose.msra.mxu0 0.0
        %765 = vmatprep.subr.mxu0 0.0
        %766 = vmatpush1.xpose.msra.mxu0 0.0
        %767 = vmatprep.subr.mxu0 0.0
        %768 = vmatpush1.xpose.msra.mxu0 0.0
        %769 = vmatprep.subr.mxu0 0.0
        %770 = vmatpush1.xpose.msra.mxu0 0.0
        %771 = vmatprep.subr.mxu0 0.0
        %772 = vmatpush1.xpose.msra.mxu0 0.0
        %773 = vmatprep.subr.mxu0 0.0
        %774 = vmatpush1.xpose.msra.mxu0 0.0
        %775 = vmatprep.subr.mxu0 0.0
        %776 = vmatpush1.xpose.msra.mxu0 0.0
        %777 = vmatprep.subr.mxu0 0.0
        %778 = vmatpush1.xpose.msra.mxu0 0.0
        %779 = vmatprep.subr.mxu0 0.0
        %780 = vmatpush1.xpose.msra.mxu0 0.0
        %781 = vmatprep.subr.mxu0 0.0
        %782 = vmatpush1.xpose.msra.mxu0 0.0
        %783 = vmatprep.subr.mxu0 0.0
        %784 = vmatpush1.xpose.msra.mxu0 0.0
        %785 = vmatprep.subr.mxu0 0.0
        %786 = vmatpush1.xpose.msra.mxu0 0.0
        %787 = vmatprep.subr.mxu0 0.0
        %788 = vmatpush1.xpose.msra.mxu0 0.0
        %789 = vmatprep.subr.mxu0 0.0
        %790 = vmatpush1.xpose.msra.mxu0 0.0
        %791 = vmatprep.subr.mxu0 0.0
        %792 = vmatpush1.xpose.msra.mxu0 0.0
        %793 = vmatprep.subr.mxu0 0.0
        %794 = vmatpush1.xpose.msra.mxu0 0.0
        %795 = vmatprep.subr.mxu0 0.0
        %796 = vmatpush1.xpose.msra.mxu0 0.0
        %797 = vmatprep.subr.mxu0 0.0
        %798 = vmatpush1.xpose.msra.mxu0 0.0
        %799 = vmatprep.subr.mxu0 0.0
        %800 = vmatpush1.xpose.msra.mxu0 0.0
        %801 = vmatprep.subr.mxu0 0.0
        %802 = vmatpush1.xpose.msra.mxu0 0.0
        %803 = vmatprep.subr.mxu0 0.0
        %804 = vmatpush1.xpose.msra.mxu0 0.0
        %805 = vmatprep.subr.mxu0 0.0
        %806 = vmatpush1.xpose.msra.mxu0 0.0
        %807 = vmatprep.subr.mxu0 0.0
        %808 = vmatpush1.xpose.msra.mxu0 0.0
        %809 = vmatprep.subr.mxu0 0.0
        %810 = vmatpush1.xpose.msra.mxu0 0.0
        %811 = vmatprep.mubr.f32.mxu0 0.0
        %812 = vmatmul.mubr.f32.gmra.mrb[0].mxu0 %v743
        %v813 = vpop.f32.mrb[0].mxu0
        %v814 = vadd.f32 0.0, %v813
        %v815 = vpop.f32.mrb[0].mxu0
        %816 = vdwg.mxu0
        %v817 = vsel %vm668, %v648, 0
        %v819 = vsel %vm668, %v655, 0
        %821 = vmatprep.subr.mxu0 0.0
        %822 = vmatpush1.xpose.msra.mxu0 %v819
        %823 = vmatprep.subr.mxu0 0.0
        %824 = vmatpush1.xpose.msra.mxu0 0.0
        %825 = vmatprep.subr.mxu0 0.0
        %826 = vmatpush1.xpose.msra.mxu0 0.0
        %827 = vmatprep.subr.mxu0 0.0
        %828 = vmatpush1.xpose.msra.mxu0 0.0
        %829 = vmatprep.subr.mxu0 0.0
        %830 = vmatpush1.xpose.msra.mxu0 0.0
        %831 = vmatprep.subr.mxu0 0.0
        %832 = vmatpush1.xpose.msra.mxu0 0.0
        %833 = vmatprep.subr.mxu0 0.0
        %834 = vmatpush1.xpose.msra.mxu0 0.0
        %835 = vmatprep.subr.mxu0 0.0
        %836 = vmatpush1.xpose.msra.mxu0 0.0
        %837 = vmatprep.subr.mxu0 0.0
        %838 = vmatpush1.xpose.msra.mxu0 0.0
        %839 = vmatprep.subr.mxu0 0.0
        %840 = vmatpush1.xpose.msra.mxu0 0.0
        %841 = vmatprep.subr.mxu0 0.0
        %842 = vmatpush1.xpose.msra.mxu0 0.0
        %843 = vmatprep.subr.mxu0 0.0
        %844 = vmatpush1.xpose.msra.mxu0 0.0
        %845 = vmatprep.subr.mxu0 0.0
        %846 = vmatpush1.xpose.msra.mxu0 0.0
        %847 = vmatprep.subr.mxu0 0.0
        %848 = vmatpush1.xpose.msra.mxu0 0.0
        %849 = vmatprep.subr.mxu0 0.0
        %850 = vmatpush1.xpose.msra.mxu0 0.0
        %851 = vmatprep.subr.mxu0 0.0
        %852 = vmatpush1.xpose.msra.mxu0 0.0
        %853 = vmatprep.subr.mxu0 0.0
        %854 = vmatpush1.xpose.msra.mxu0 0.0
        %855 = vmatprep.subr.mxu0 0.0
        %856 = vmatpush1.xpose.msra.mxu0 0.0
        %857 = vmatprep.subr.mxu0 0.0
        %858 = vmatpush1.xpose.msra.mxu0 0.0
        %859 = vmatprep.subr.mxu0 0.0
        %860 = vmatpush1.xpose.msra.mxu0 0.0
        %861 = vmatprep.subr.mxu0 0.0
        %862 = vmatpush1.xpose.msra.mxu0 0.0
        %863 = vmatprep.subr.mxu0 0.0
        %864 = vmatpush1.xpose.msra.mxu0 0.0
        %865 = vmatprep.subr.mxu0 0.0
        %866 = vmatpush1.xpose.msra.mxu0 0.0
        %867 = vmatprep.subr.mxu0 0.0
        %868 = vmatpush1.xpose.msra.mxu0 0.0
        %869 = vmatprep.subr.mxu0 0.0
        %870 = vmatpush1.xpose.msra.mxu0 0.0
        %871 = vmatprep.subr.mxu0 0.0
        %872 = vmatpush1.xpose.msra.mxu0 0.0
        %873 = vmatprep.subr.mxu0 0.0
        %874 = vmatpush1.xpose.msra.mxu0 0.0
        %875 = vmatprep.subr.mxu0 0.0
        %876 = vmatpush1.xpose.msra.mxu0 0.0
        %877 = vmatprep.subr.mxu0 0.0
        %878 = vmatpush1.xpose.msra.mxu0 0.0
        %879 = vmatprep.subr.mxu0 0.0
        %880 = vmatpush1.xpose.msra.mxu0 0.0
        %881 = vmatprep.subr.mxu0 0.0
        %882 = vmatpush1.xpose.msra.mxu0 0.0
        %883 = vmatprep.subr.mxu0 0.0
        %884 = vmatpush1.xpose.msra.mxu0 0.0
        %885 = vmatprep.mubr.f32.mxu0 0.0
        %886 = vmatmul.mubr.f32.gmra.mrb[0].mxu0 %v817
        %v887 = vpop.f32.mrb[0].mxu0
        %v888 = vadd.f32 0.0, %v887
        %v889 = vpop.f32.mrb[0].mxu0
        %890 = vdwg.mxu0
        %v891 = vsel %vm668, %v650, 0
        %v893 = vsel %vm668, %v657, 0
        %895 = vmatprep.subr.mxu0 0.0
        %896 = vmatpush1.xpose.msra.mxu0 %v893
        %897 = vmatprep.subr.mxu0 0.0
        %898 = vmatpush1.xpose.msra.mxu0 0.0
        %899 = vmatprep.subr.mxu0 0.0
        %900 = vmatpush1.xpose.msra.mxu0 0.0
        %901 = vmatprep.subr.mxu0 0.0
        %902 = vmatpush1.xpose.msra.mxu0 0.0
        %903 = vmatprep.subr.mxu0 0.0
        %904 = vmatpush1.xpose.msra.mxu0 0.0
        %905 = vmatprep.subr.mxu0 0.0
        %906 = vmatpush1.xpose.msra.mxu0 0.0
        %907 = vmatprep.subr.mxu0 0.0
        %908 = vmatpush1.xpose.msra.mxu0 0.0
        %909 = vmatprep.subr.mxu0 0.0
        %910 = vmatpush1.xpose.msra.mxu0 0.0
        %911 = vmatprep.subr.mxu0 0.0
        %912 = vmatpush1.xpose.msra.mxu0 0.0
        %913 = vmatprep.subr.mxu0 0.0
        %914 = vmatpush1.xpose.msra.mxu0 0.0
        %915 = vmatprep.subr.mxu0 0.0
        %916 = vmatpush1.xpose.msra.mxu0 0.0
        %917 = vmatprep.subr.mxu0 0.0
        %918 = vmatpush1.xpose.msra.mxu0 0.0
        %919 = vmatprep.subr.mxu0 0.0
        %920 = vmatpush1.xpose.msra.mxu0 0.0
        %921 = vmatprep.subr.mxu0 0.0
        %922 = vmatpush1.xpose.msra.mxu0 0.0
        %923 = vmatprep.subr.mxu0 0.0
        %924 = vmatpush1.xpose.msra.mxu0 0.0
        %925 = vmatprep.subr.mxu0 0.0
        %926 = vmatpush1.xpose.msra.mxu0 0.0
        %927 = vmatprep.subr.mxu0 0.0
        %928 = vmatpush1.xpose.msra.mxu0 0.0
        %929 = vmatprep.subr.mxu0 0.0
        %930 = vmatpush1.xpose.msra.mxu0 0.0
        %931 = vmatprep.subr.mxu0 0.0
        %932 = vmatpush1.xpose.msra.mxu0 0.0
        %933 = vmatprep.subr.mxu0 0.0
        %934 = vmatpush1.xpose.msra.mxu0 0.0
        %935 = vmatprep.subr.mxu0 0.0
        %936 = vmatpush1.xpose.msra.mxu0 0.0
        %937 = vmatprep.subr.mxu0 0.0
        %938 = vmatpush1.xpose.msra.mxu0 0.0
        %939 = vmatprep.subr.mxu0 0.0
        %940 = vmatpush1.xpose.msra.mxu0 0.0
        %941 = vmatprep.subr.mxu0 0.0
        %942 = vmatpush1.xpose.msra.mxu0 0.0
        %943 = vmatprep.subr.mxu0 0.0
        %944 = vmatpush1.xpose.msra.mxu0 0.0
        %945 = vmatprep.subr.mxu0 0.0
        %946 = vmatpush1.xpose.msra.mxu0 0.0
        %947 = vmatprep.subr.mxu0 0.0
        %948 = vmatpush1.xpose.msra.mxu0 0.0
        %949 = vmatprep.subr.mxu0 0.0
        %950 = vmatpush1.xpose.msra.mxu0 0.0
        %951 = vmatprep.subr.mxu0 0.0
        %952 = vmatpush1.xpose.msra.mxu0 0.0
        %953 = vmatprep.subr.mxu0 0.0
        %954 = vmatpush1.xpose.msra.mxu0 0.0
        %955 = vmatprep.subr.mxu0 0.0
        %956 = vmatpush1.xpose.msra.mxu0 0.0
        %957 = vmatprep.subr.mxu0 0.0
        %958 = vmatpush1.xpose.msra.mxu0 0.0
        %959 = vmatprep.mubr.f32.mxu0 0.0
        %960 = vmatmul.mubr.f32.gmra.mrb[0].mxu0 %v891
        %v961 = vpop.f32.mrb[0].mxu0
        %v962 = vadd.f32 0.0, %v961
        %v963 = vpop.f32.mrb[0].mxu0
        %964 = vdwg.mxu0
        %v965 = vsel %vm668, %v740, -inf
        %966 = vmax.xlane.f32.xlu0 %v965
        %v967 = vpop.xlane.xlu0 %966
        %v968 = vsel %vm668, %v814, -inf
        %969 = vmax.xlane.f32.xlu0 %v968
        %v970 = vpop.xlane.xlu0 %969
        %v971 = vsel %vm668, %v888, -inf
        %972 = vmax.xlane.f32.xlu0 %v971
        %v973 = vpop.xlane.xlu0 %972
        %v974 = vsel %vm668, %v962, -inf
        %975 = vmax.xlane.f32.xlu0 %v974
        %v976 = vpop.xlane.xlu0 %975
        %v977 = vsub.f32 %v740, %v967
        %v978 = vsub.f32 %v814, %v970
        %v979 = vsub.f32 %v888, %v973
        %v980 = vsub.f32 %v962, %v976
        %v981 = vmul.f32 %v977, 1.442695
        %v982 = vpow.pop %v981
        %v983 = vmul.f32 %v978, 1.442695
        %v984 = vpow.pop %v983
        %v985 = vmul.f32 %v979, 1.442695
        %v986 = vpow.pop %v985
        %v987 = vmul.f32 %v980, 1.442695
        %v988 = vpow.pop %v987
        %v989 = vsel %vm668, %v982, 0.0
        %990 = vadd.xlane.f32.xlu0 %v989
        %v991 = vpop.xlane.xlu0 %990
        %v992 = vsel %vm668, %v984, 0.0
        %993 = vadd.xlane.f32.xlu0 %v992
        %v994 = vpop.xlane.xlu0 %993
        %v995 = vsel %vm668, %v986, 0.0
        %996 = vadd.xlane.f32.xlu0 %v995
        %v997 = vpop.xlane.xlu0 %996
        %v998 = vsel %vm668, %v988, 0.0
        %999 = vadd.xlane.f32.xlu0 %v998
        %v1000 = vpop.xlane.xlu0 %999
        %v1001 = vrcp.pop %v991
        %v1002 = vmul.f32 %v982, %v1001
        %v1003 = vrcp.pop %v994
        %v1004 = vmul.f32 %v984, %v1003
        %v1005 = vrcp.pop %v997
        %v1006 = vmul.f32 %v986, %v1005
        %v1007 = vrcp.pop %v1000
        %v1008 = vmul.f32 %v988, %v1007
        %v1010 = vsel %vm668, %v1002, 0
        %1012 = vmatprep.subr.mxu0 0.0
        %1013 = vmatpush1.msra.mxu0 %v641
        %1014 = vmatprep.subr.mxu0 0.0
        %1015 = vmatpush1.msra.mxu0 0.0
        %1016 = vmatprep.subr.mxu0 0.0
        %1017 = vmatpush1.msra.mxu0 0.0
        %1018 = vmatprep.subr.mxu0 0.0
        %1019 = vmatpush1.msra.mxu0 0.0
        %1020 = vmatprep.subr.mxu0 0.0
        %1021 = vmatpush1.msra.mxu0 0.0
        %1022 = vmatprep.subr.mxu0 0.0
        %1023 = vmatpush1.msra.mxu0 0.0
        %1024 = vmatprep.subr.mxu0 0.0
        %1025 = vmatpush1.msra.mxu0 0.0
        %1026 = vmatprep.subr.mxu0 0.0
        %1027 = vmatpush1.msra.mxu0 0.0
        %1028 = vmatprep.subr.mxu0 0.0
        %1029 = vmatpush1.msra.mxu0 0.0
        %1030 = vmatprep.subr.mxu0 0.0
        %1031 = vmatpush1.msra.mxu0 0.0
        %1032 = vmatprep.subr.mxu0 0.0
        %1033 = vmatpush1.msra.mxu0 0.0
        %1034 = vmatprep.subr.mxu0 0.0
        %1035 = vmatpush1.msra.mxu0 0.0
        %1036 = vmatprep.subr.mxu0 0.0
        %1037 = vmatpush1.msra.mxu0 0.0
        %1038 = vmatprep.subr.mxu0 0.0
        %1039 = vmatpush1.msra.mxu0 0.0
        %1040 = vmatprep.subr.mxu0 0.0
        %1041 = vmatpush1.msra.mxu0 0.0
        %1042 = vmatprep.subr.mxu0 0.0
        %1043 = vmatpush1.msra.mxu0 0.0
        %1044 = vmatprep.subr.mxu0 0.0
        %1045 = vmatpush1.msra.mxu0 0.0
        %1046 = vmatprep.subr.mxu0 0.0
        %1047 = vmatpush1.msra.mxu0 0.0
        %1048 = vmatprep.subr.mxu0 0.0
        %1049 = vmatpush1.msra.mxu0 0.0
        %1050 = vmatprep.subr.mxu0 0.0
        %1051 = vmatpush1.msra.mxu0 0.0
        %1052 = vmatprep.subr.mxu0 0.0
        %1053 = vmatpush1.msra.mxu0 0.0
        %1054 = vmatprep.subr.mxu0 0.0
        %1055 = vmatpush1.msra.mxu0 0.0
        %1056 = vmatprep.subr.mxu0 0.0
        %1057 = vmatpush1.msra.mxu0 0.0
        %1058 = vmatprep.subr.mxu0 0.0
        %1059 = vmatpush1.msra.mxu0 0.0
        %1060 = vmatprep.subr.mxu0 0.0
        %1061 = vmatpush1.msra.mxu0 0.0
        %1062 = vmatprep.subr.mxu0 0.0
        %1063 = vmatpush1.msra.mxu0 0.0
        %1064 = vmatprep.subr.mxu0 0.0
        %1065 = vmatpush1.msra.mxu0 0.0
        %1066 = vmatprep.subr.mxu0 0.0
        %1067 = vmatpush1.msra.mxu0 0.0
        %1068 = vmatprep.subr.mxu0 0.0
        %1069 = vmatpush1.msra.mxu0 0.0
        %1070 = vmatprep.subr.mxu0 0.0
        %1071 = vmatpush1.msra.mxu0 0.0
        %1072 = vmatprep.subr.mxu0 0.0
        %1073 = vmatpush1.msra.mxu0 0.0
        %1074 = vmatprep.subr.mxu0 0.0
        %1075 = vmatpush1.msra.mxu0 0.0
        %1076 = vmatprep.mubr.f32.mxu0 0.0
        %1077 = vmatmul.mubr.f32.gmra.mrb[0].mxu0 %v1010
        %v1078 = vpop.f32.mrb[0].mxu0
        %v1079 = vadd.f32 0.0, %v1078
        %v1080 = vpop.f32.mrb[0].mxu0
        %1081 = vdwg.mxu0
        %v1083 = vsel %vm668, %v1004, 0
        %1085 = vmatprep.subr.mxu0 0.0
        %1086 = vmatpush1.msra.mxu0 %v660
        %1087 = vmatprep.subr.mxu0 0.0
        %1088 = vmatpush1.msra.mxu0 0.0
        %1089 = vmatprep.subr.mxu0 0.0
        %1090 = vmatpush1.msra.mxu0 0.0
        %1091 = vmatprep.subr.mxu0 0.0
        %1092 = vmatpush1.msra.mxu0 0.0
        %1093 = vmatprep.subr.mxu0 0.0
        %1094 = vmatpush1.msra.mxu0 0.0
        %1095 = vmatprep.subr.mxu0 0.0
        %1096 = vmatpush1.msra.mxu0 0.0
        %1097 = vmatprep.subr.mxu0 0.0
        %1098 = vmatpush1.msra.mxu0 0.0
        %1099 = vmatprep.subr.mxu0 0.0
        %1100 = vmatpush1.msra.mxu0 0.0
        %1101 = vmatprep.subr.mxu0 0.0
        %1102 = vmatpush1.msra.mxu0 0.0
        %1103 = vmatprep.subr.mxu0 0.0
        %1104 = vmatpush1.msra.mxu0 0.0
        %1105 = vmatprep.subr.mxu0 0.0
        %1106 = vmatpush1.msra.mxu0 0.0
        %1107 = vmatprep.subr.mxu0 0.0
        %1108 = vmatpush1.msra.mxu0 0.0
        %1109 = vmatprep.subr.mxu0 0.0
        %1110 = vmatpush1.msra.mxu0 0.0
        %1111 = vmatprep.subr.mxu0 0.0
        %1112 = vmatpush1.msra.mxu0 0.0
        %1113 = vmatprep.subr.mxu0 0.0
        %1114 = vmatpush1.msra.mxu0 0.0
        %1115 = vmatprep.subr.mxu0 0.0
        %1116 = vmatpush1.msra.mxu0 0.0
        %1117 = vmatprep.subr.mxu0 0.0
        %1118 = vmatpush1.msra.mxu0 0.0
        %1119 = vmatprep.subr.mxu0 0.0
        %1120 = vmatpush1.msra.mxu0 0.0
        %1121 = vmatprep.subr.mxu0 0.0
        %1122 = vmatpush1.msra.mxu0 0.0
        %1123 = vmatprep.subr.mxu0 0.0
        %1124 = vmatpush1.msra.mxu0 0.0
        %1125 = vmatprep.subr.mxu0 0.0
        %1126 = vmatpush1.msra.mxu0 0.0
        %1127 = vmatprep.subr.mxu0 0.0
        %1128 = vmatpush1.msra.mxu0 0.0
        %1129 = vmatprep.subr.mxu0 0.0
        %1130 = vmatpush1.msra.mxu0 0.0
        %1131 = vmatprep.subr.mxu0 0.0
        %1132 = vmatpush1.msra.mxu0 0.0
        %1133 = vmatprep.subr.mxu0 0.0
        %1134 = vmatpush1.msra.mxu0 0.0
        %1135 = vmatprep.subr.mxu0 0.0
        %1136 = vmatpush1.msra.mxu0 0.0
        %1137 = vmatprep.subr.mxu0 0.0
        %1138 = vmatpush1.msra.mxu0 0.0
        %1139 = vmatprep.subr.mxu0 0.0
        %1140 = vmatpush1.msra.mxu0 0.0
        %1141 = vmatprep.subr.mxu0 0.0
        %1142 = vmatpush1.msra.mxu0 0.0
        %1143 = vmatprep.subr.mxu0 0.0
        %1144 = vmatpush1.msra.mxu0 0.0
        %1145 = vmatprep.subr.mxu0 0.0
        %1146 = vmatpush1.msra.mxu0 0.0
        %1147 = vmatprep.subr.mxu0 0.0
        %1148 = vmatpush1.msra.mxu0 0.0
        %1149 = vmatprep.mubr.f32.mxu0 0.0
        %1150 = vmatmul.mubr.f32.gmra.mrb[0].mxu0 %v1083
        %v1151 = vpop.f32.mrb[0].mxu0
        %v1152 = vadd.f32 0.0, %v1151
        %v1153 = vpop.f32.mrb[0].mxu0
        %1154 = vdwg.mxu0
        %v1156 = vsel %vm668, %v1006, 0
        %1158 = vmatprep.subr.mxu0 0.0
        %1159 = vmatpush1.msra.mxu0 %v663
        %1160 = vmatprep.subr.mxu0 0.0
        %1161 = vmatpush1.msra.mxu0 0.0
        %1162 = vmatprep.subr.mxu0 0.0
        %1163 = vmatpush1.msra.mxu0 0.0
        %1164 = vmatprep.subr.mxu0 0.0
        %1165 = vmatpush1.msra.mxu0 0.0
        %1166 = vmatprep.subr.mxu0 0.0
        %1167 = vmatpush1.msra.mxu0 0.0
        %1168 = vmatprep.subr.mxu0 0.0
        %1169 = vmatpush1.msra.mxu0 0.0
        %1170 = vmatprep.subr.mxu0 0.0
        %1171 = vmatpush1.msra.mxu0 0.0
        %1172 = vmatprep.subr.mxu0 0.0
        %1173 = vmatpush1.msra.mxu0 0.0
        %1174 = vmatprep.subr.mxu0 0.0
        %1175 = vmatpush1.msra.mxu0 0.0
        %1176 = vmatprep.subr.mxu0 0.0
        %1177 = vmatpush1.msra.mxu0 0.0
        %1178 = vmatprep.subr.mxu0 0.0
        %1179 = vmatpush1.msra.mxu0 0.0
        %1180 = vmatprep.subr.mxu0 0.0
        %1181 = vmatpush1.msra.mxu0 0.0
        %1182 = vmatprep.subr.mxu0 0.0
        %1183 = vmatpush1.msra.mxu0 0.0
        %1184 = vmatprep.subr.mxu0 0.0
        %1185 = vmatpush1.msra.mxu0 0.0
        %1186 = vmatprep.subr.mxu0 0.0
        %1187 = vmatpush1.msra.mxu0 0.0
        %1188 = vmatprep.subr.mxu0 0.0
        %1189 = vmatpush1.msra.mxu0 0.0
        %1190 = vmatprep.subr.mxu0 0.0
        %1191 = vmatpush1.msra.mxu0 0.0
        %1192 = vmatprep.subr.mxu0 0.0
        %1193 = vmatpush1.msra.mxu0 0.0
        %1194 = vmatprep.subr.mxu0 0.0
        %1195 = vmatpush1.msra.mxu0 0.0
        %1196 = vmatprep.subr.mxu0 0.0
        %1197 = vmatpush1.msra.mxu0 0.0
        %1198 = vmatprep.subr.mxu0 0.0
        %1199 = vmatpush1.msra.mxu0 0.0
        %1200 = vmatprep.subr.mxu0 0.0
        %1201 = vmatpush1.msra.mxu0 0.0
        %1202 = vmatprep.subr.mxu0 0.0
        %1203 = vmatpush1.msra.mxu0 0.0
        %1204 = vmatprep.subr.mxu0 0.0
        %1205 = vmatpush1.msra.mxu0 0.0
        %1206 = vmatprep.subr.mxu0 0.0
        %1207 = vmatpush1.msra.mxu0 0.0
        %1208 = vmatprep.subr.mxu0 0.0
        %1209 = vmatpush1.msra.mxu0 0.0
        %1210 = vmatprep.subr.mxu0 0.0
        %1211 = vmatpush1.msra.mxu0 0.0
        %1212 = vmatprep.subr.mxu0 0.0
        %1213 = vmatpush1.msra.mxu0 0.0
        %1214 = vmatprep.subr.mxu0 0.0
        %1215 = vmatpush1.msra.mxu0 0.0
        %1216 = vmatprep.subr.mxu0 0.0
        %1217 = vmatpush1.msra.mxu0 0.0
        %1218 = vmatprep.subr.mxu0 0.0
        %1219 = vmatpush1.msra.mxu0 0.0
        %1220 = vmatprep.subr.mxu0 0.0
        %1221 = vmatpush1.msra.mxu0 0.0
        %1222 = vmatprep.mubr.f32.mxu0 0.0
        %1223 = vmatmul.mubr.f32.gmra.mrb[0].mxu0 %v1156
        %v1224 = vpop.f32.mrb[0].mxu0
        %v1225 = vadd.f32 0.0, %v1224
        %v1226 = vpop.f32.mrb[0].mxu0
        %1227 = vdwg.mxu0
        %v1229 = vsel %vm668, %v1008, 0
        %1231 = vmatprep.subr.mxu0 0.0
        %1232 = vmatpush1.msra.mxu0 %v666
        %1233 = vmatprep.subr.mxu0 0.0
        %1234 = vmatpush1.msra.mxu0 0.0
        %1235 = vmatprep.subr.mxu0 0.0
        %1236 = vmatpush1.msra.mxu0 0.0
        %1237 = vmatprep.subr.mxu0 0.0
        %1238 = vmatpush1.msra.mxu0 0.0
        %1239 = vmatprep.subr.mxu0 0.0
        %1240 = vmatpush1.msra.mxu0 0.0
        %1241 = vmatprep.subr.mxu0 0.0
        %1242 = vmatpush1.msra.mxu0 0.0
        %1243 = vmatprep.subr.mxu0 0.0
        %1244 = vmatpush1.msra.mxu0 0.0
        %1245 = vmatprep.subr.mxu0 0.0
        %1246 = vmatpush1.msra.mxu0 0.0
        %1247 = vmatprep.subr.mxu0 0.0
        %1248 = vmatpush1.msra.mxu0 0.0
        %1249 = vmatprep.subr.mxu0 0.0
        %1250 = vmatpush1.msra.mxu0 0.0
        %1251 = vmatprep.subr.mxu0 0.0
        %1252 = vmatpush1.msra.mxu0 0.0
        %1253 = vmatprep.subr.mxu0 0.0
        %1254 = vmatpush1.msra.mxu0 0.0
        %1255 = vmatprep.subr.mxu0 0.0
        %1256 = vmatpush1.msra.mxu0 0.0
        %1257 = vmatprep.subr.mxu0 0.0
        %1258 = vmatpush1.msra.mxu0 0.0
        %1259 = vmatprep.subr.mxu0 0.0
        %1260 = vmatpush1.msra.mxu0 0.0
        %1261 = vmatprep.subr.mxu0 0.0
        %1262 = vmatpush1.msra.mxu0 0.0
        %1263 = vmatprep.subr.mxu0 0.0
        %1264 = vmatpush1.msra.mxu0 0.0
        %1265 = vmatprep.subr.mxu0 0.0
        %1266 = vmatpush1.msra.mxu0 0.0
        %1267 = vmatprep.subr.mxu0 0.0
        %1268 = vmatpush1.msra.mxu0 0.0
        %1269 = vmatprep.subr.mxu0 0.0
        %1270 = vmatpush1.msra.mxu0 0.0
        %1271 = vmatprep.subr.mxu0 0.0
        %1272 = vmatpush1.msra.mxu0 0.0
        %1273 = vmatprep.subr.mxu0 0.0
        %1274 = vmatpush1.msra.mxu0 0.0
        %1275 = vmatprep.subr.mxu0 0.0
        %1276 = vmatpush1.msra.mxu0 0.0
        %1277 = vmatprep.subr.mxu0 0.0
        %1278 = vmatpush1.msra.mxu0 0.0
        %1279 = vmatprep.subr.mxu0 0.0
        %1280 = vmatpush1.msra.mxu0 0.0
        %1281 = vmatprep.subr.mxu0 0.0
        %1282 = vmatpush1.msra.mxu0 0.0
        %1283 = vmatprep.subr.mxu0 0.0
        %1284 = vmatpush1.msra.mxu0 0.0
        %1285 = vmatprep.subr.mxu0 0.0
        %1286 = vmatpush1.msra.mxu0 0.0
        %1287 = vmatprep.subr.mxu0 0.0
        %1288 = vmatpush1.msra.mxu0 0.0
        %1289 = vmatprep.subr.mxu0 0.0
        %1290 = vmatpush1.msra.mxu0 0.0
        %1291 = vmatprep.subr.mxu0 0.0
        %1292 = vmatpush1.msra.mxu0 0.0
        %1293 = vmatprep.subr.mxu0 0.0
        %1294 = vmatpush1.msra.mxu0 0.0
        %1295 = vmatprep.mubr.f32.mxu0 0.0
        %1296 = vmatmul.mubr.f32.gmra.mrb[0].mxu0 %v1229
        %v1297 = vpop.f32.mrb[0].mxu0
        %v1298 = vadd.f32 0.0, %v1297
        %v1299 = vpop.f32.mrb[0].mxu0
        %1300 = vdwg.mxu0
        %1302 = vrot.lane.b32.xlu0 %v1152, 8
        %v1303 = vpop.permute.xlu0 %1302
        %1306 = vrot.lane.b32.xlu0 %v1225, 16
        %v1307 = vpop.permute.xlu0 %1306
        %1310 = vrot.lane.b32.xlu0 %v1298, 24
        %v1311 = vpop.permute.xlu0 %1310
        %v1313 = vsel %vm668, %v1079, %v1303
        %vm1314 = vcmask 130048
        %v1315 = vsel %vm1314, %v1313, %v1307
        %vm1316 = vcmask 195584
        %v1317 = vsel %vm1316, %v1315, %v1311
        %v1318 = vld [vmem:[%s4] sm:$0xff]
        %v1319 = vld [vmem:[%s4 + $0x8] sm:$0xff]
        %v1320 = vld [vmem:[%s4 + $0x10] sm:$0xff]
        %v1321 = vld [vmem:[%s4 + $0x18] sm:$0xff]
        %v1322 = vlaneseq
        %v1323 = vshrl.u32 %v1322, 7
        %v1324 = vsub.s32 3, %v1323
        %v1325 = vrot.slane %v395, %v1324
        %v1327 = vsel %vm405, %v1317, 0
        %1329 = vmatprep.subr.mxu0 0.0
        %1330 = vmatpush1.msra.mxu0 %v1318
        %1331 = vmatprep.subr.mxu0 0.0
        %1332 = vmatpush1.msra.mxu0 %v1319
        %1333 = vmatprep.subr.mxu0 0.0
        %1334 = vmatpush1.msra.mxu0 %v1320
        %1335 = vmatprep.subr.mxu0 0.0
        %1336 = vmatpush1.msra.mxu0 %v1321
        %1337 = vmatprep.subr.mxu0 0.0
        %1338 = vmatpush1.msra.mxu0 0.0
        %1339 = vmatprep.subr.mxu0 0.0
        %1340 = vmatpush1.msra.mxu0 0.0
        %1341 = vmatprep.subr.mxu0 0.0
        %1342 = vmatpush1.msra.mxu0 0.0
        %1343 = vmatprep.subr.mxu0 0.0
        %1344 = vmatpush1.msra.mxu0 0.0
        %1345 = vmatprep.subr.mxu0 0.0
        %1346 = vmatpush1.msra.mxu0 0.0
        %1347 = vmatprep.subr.mxu0 0.0
        %1348 = vmatpush1.msra.mxu0 0.0
        %1349 = vmatprep.subr.mxu0 0.0
        %1350 = vmatpush1.msra.mxu0 0.0
        %1351 = vmatprep.subr.mxu0 0.0
        %1352 = vmatpush1.msra.mxu0 0.0
        %1353 = vmatprep.subr.mxu0 0.0
        %1354 = vmatpush1.msra.mxu0 0.0
        %1355 = vmatprep.subr.mxu0 0.0
        %1356 = vmatpush1.msra.mxu0 0.0
        %1357 = vmatprep.subr.mxu0 0.0
        %1358 = vmatpush1.msra.mxu0 0.0
        %1359 = vmatprep.subr.mxu0 0.0
        %1360 = vmatpush1.msra.mxu0 0.0
        %1361 = vmatprep.subr.mxu0 0.0
        %1362 = vmatpush1.msra.mxu0 0.0
        %1363 = vmatprep.subr.mxu0 0.0
        %1364 = vmatpush1.msra.mxu0 0.0
        %1365 = vmatprep.subr.mxu0 0.0
        %1366 = vmatpush1.msra.mxu0 0.0
        %1367 = vmatprep.subr.mxu0 0.0
        %1368 = vmatpush1.msra.mxu0 0.0
        %1369 = vmatprep.subr.mxu0 0.0
        %1370 = vmatpush1.msra.mxu0 0.0
        %1371 = vmatprep.subr.mxu0 0.0
        %1372 = vmatpush1.msra.mxu0 0.0
        %1373 = vmatprep.subr.mxu0 0.0
        %1374 = vmatpush1.msra.mxu0 0.0
        %1375 = vmatprep.subr.mxu0 0.0
        %1376 = vmatpush1.msra.mxu0 0.0
        %1377 = vmatprep.subr.mxu0 0.0
        %1378 = vmatpush1.msra.mxu0 0.0
        %1379 = vmatprep.subr.mxu0 0.0
        %1380 = vmatpush1.msra.mxu0 0.0
        %1381 = vmatprep.subr.mxu0 0.0
        %1382 = vmatpush1.msra.mxu0 0.0
        %1383 = vmatprep.subr.mxu0 0.0
        %1384 = vmatpush1.msra.mxu0 0.0
        %1385 = vmatprep.subr.mxu0 0.0
        %1386 = vmatpush1.msra.mxu0 0.0
        %1387 = vmatprep.subr.mxu0 0.0
        %1388 = vmatpush1.msra.mxu0 0.0
        %1389 = vmatprep.subr.mxu0 0.0
        %1390 = vmatpush1.msra.mxu0 0.0
        %1391 = vmatprep.subr.mxu0 0.0
        %1392 = vmatpush1.msra.mxu0 0.0
        %1393 = vmatprep.mubr.f32.mxu0 0.0
        %1394 = vmatmul.mubr.f32.gmra.mrb[0].mxu0 %v1327
        %v1395 = vpop.f32.mrb[0].mxu0
        %v1396 = vadd.f32 %v1325, %v1395
        %v1397 = vpop.f32.mrb[0].mxu0
        %1398 = vdwg.mxu0
        %v1399 = vadd.f32 %v392, %v1396
        %v1400 = vsel %vm405, %v1399, 0.0
        %1401 = vadd.xlane.f32.xlu0 %v1400
        %v1402 = vpop.xlane.xlu0 %1401
        %v1403 = vrcp.pop 32.0
        %v1404 = vmul.f32 %v1402, %v1403
        %v1405 = vsub.f32 %v1399, %v1404
        %v1406 = vmul.f32 %v1405, %v1405
        %v1407 = vsel %vm405, %v1406, 0.0
        %1408 = vadd.xlane.f32.xlu0 %v1407
        %v1409 = vpop.xlane.xlu0 %1408
        %v1410 = vmul.f32 %v1409, %v1403
        %v1411 = vadd.f32 %v1410, 1e-05
        %v1412 = vrsqrt.pop %v1411
        %v1413 = vmul.f32 %v1405, %v1412
        %v1414 = vlaneseq
        %v1415 = vshrl.u32 %v1414, 7
        %v1416 = vsub.s32 5, %v1415
        %v1417 = vrot.slane %v395, %v1416
        %v1418 = vmul.f32 %v1413, %v1417
        %v1419 = vlaneseq
        %v1420 = vshrl.u32 %v1419, 7
        %v1421 = vsub.s32 6, %v1420
        %v1422 = vrot.slane %v395, %v1421
        %v1423 = vadd.f32 %v1418, %v1422
        %v1424 = vld [vmem:[%s5] sm:$0xff]
        %v1425 = vld [vmem:[%s5 + $0x8] sm:$0xff]
        %v1426 = vld [vmem:[%s5 + $0x10] sm:$0xff]
        %v1427 = vld [vmem:[%s5 + $0x18] sm:$0xff]
        %v1428 = vlaneseq
        %v1429 = vshrl.u32 %v1428, 7
        %v1430 = vsub.s32 1, %v1429
        %v1431 = vrot.slane %v396, %v1430
        %v1433 = vsel %vm405, %v1423, 0
        %1435 = vmatprep.subr.mxu0 0.0
        %1436 = vmatpush1.msra.mxu0 %v1424
        %1437 = vmatprep.subr.mxu0 0.0
        %1438 = vmatpush1.msra.mxu0 %v1425
        %1439 = vmatprep.subr.mxu0 0.0
        %1440 = vmatpush1.msra.mxu0 %v1426
        %1441 = vmatprep.subr.mxu0 0.0
        %1442 = vmatpush1.msra.mxu0 %v1427
        %1443 = vmatprep.subr.mxu0 0.0
        %1444 = vmatpush1.msra.mxu0 0.0
        %1445 = vmatprep.subr.mxu0 0.0
        %1446 = vmatpush1.msra.mxu0 0.0
        %1447 = vmatprep.subr.mxu0 0.0
        %1448 = vmatpush1.msra.mxu0 0.0
        %1449 = vmatprep.subr.mxu0 0.0
        %1450 = vmatpush1.msra.mxu0 0.0
        %1451 = vmatprep.subr.mxu0 0.0
        %1452 = vmatpush1.msra.mxu0 0.0
        %1453 = vmatprep.subr.mxu0 0.0
        %1454 = vmatpush1.msra.mxu0 0.0
        %1455 = vmatprep.subr.mxu0 0.0
        %1456 = vmatpush1.msra.mxu0 0.0
        %1457 = vmatprep.subr.mxu0 0.0
        %1458 = vmatpush1.msra.mxu0 0.0
        %1459 = vmatprep.subr.mxu0 0.0
        %1460 = vmatpush1.msra.mxu0 0.0
        %1461 = vmatprep.subr.mxu0 0.0
        %1462 = vmatpush1.msra.mxu0 0.0
        %1463 = vmatprep.subr.mxu0 0.0
        %1464 = vmatpush1.msra.mxu0 0.0
        %1465 = vmatprep.subr.mxu0 0.0
        %1466 = vmatpush1.msra.mxu0 0.0
        %1467 = vmatprep.subr.mxu0 0.0
        %1468 = vmatpush1.msra.mxu0 0.0
        %1469 = vmatprep.subr.mxu0 0.0
        %1470 = vmatpush1.msra.mxu0 0.0
        %1471 = vmatprep.subr.mxu0 0.0
        %1472 = vmatpush1.msra.mxu0 0.0
        %1473 = vmatprep.subr.mxu0 0.0
        %1474 = vmatpush1.msra.mxu0 0.0
        %1475 = vmatprep.subr.mxu0 0.0
        %1476 = vmatpush1.msra.mxu0 0.0
        %1477 = vmatprep.subr.mxu0 0.0
        %1478 = vmatpush1.msra.mxu0 0.0
        %1479 = vmatprep.subr.mxu0 0.0
        %1480 = vmatpush1.msra.mxu0 0.0
        %1481 = vmatprep.subr.mxu0 0.0
        %1482 = vmatpush1.msra.mxu0 0.0
        %1483 = vmatprep.subr.mxu0 0.0
        %1484 = vmatpush1.msra.mxu0 0.0
        %1485 = vmatprep.subr.mxu0 0.0
        %1486 = vmatpush1.msra.mxu0 0.0
        %1487 = vmatprep.subr.mxu0 0.0
        %1488 = vmatpush1.msra.mxu0 0.0
        %1489 = vmatprep.subr.mxu0 0.0
        %1490 = vmatpush1.msra.mxu0 0.0
        %1491 = vmatprep.subr.mxu0 0.0
        %1492 = vmatpush1.msra.mxu0 0.0
        %1493 = vmatprep.subr.mxu0 0.0
        %1494 = vmatpush1.msra.mxu0 0.0
        %1495 = vmatprep.subr.mxu0 0.0
        %1496 = vmatpush1.msra.mxu0 0.0
        %1497 = vmatprep.subr.mxu0 0.0
        %1498 = vmatpush1.msra.mxu0 0.0
        %1499 = vmatprep.mubr.f32.mxu0 0.0
        %1500 = vmatmul.mubr.f32.gmra.mrb[0].mxu0 %v1433
        %v1501 = vpop.f32.mrb[0].mxu0
        %v1502 = vadd.f32 %v1431, %v1501
        %v1503 = vpop.f32.mrb[0].mxu0
        %1504 = vdwg.mxu0
        %v1505 = vmax.f32 %v1502, 0.0
        %v1506 = vld [vmem:[%s6] sm:$0xff]
        %v1507 = vld [vmem:[%s6 + $0x8] sm:$0xff]
        %v1508 = vld [vmem:[%s6 + $0x10] sm:$0xff]
        %v1509 = vld [vmem:[%s6 + $0x18] sm:$0xff]
        %v1510 = vld [vmem:[%s6 + $0x20] sm:$0xff]
        %v1511 = vld [vmem:[%s6 + $0x28] sm:$0xff]
        %v1512 = vld [vmem:[%s6 + $0x30] sm:$0xff]
        %v1513 = vld [vmem:[%s6 + $0x38] sm:$0xff]
        %v1514 = vld [vmem:[%s6 + $0x40] sm:$0xff]
        %v1515 = vld [vmem:[%s6 + $0x48] sm:$0xff]
        %v1516 = vld [vmem:[%s6 + $0x50] sm:$0xff]
        %v1517 = vld [vmem:[%s6 + $0x58] sm:$0xff]
        %v1518 = vld [vmem:[%s6 + $0x60] sm:$0xff]
        %v1519 = vld [vmem:[%s6 + $0x68] sm:$0xff]
        %v1520 = vld [vmem:[%s6 + $0x70] sm:$0xff]
        %v1521 = vld [vmem:[%s6 + $0x78] sm:$0xff]
        %v1522 = vlaneseq
        %v1523 = vshrl.u32 %v1522, 7
        %v1524 = vsub.s32 4, %v1523
        %v1525 = vrot.slane %v395, %v1524
        %1526 = vmatprep.subr.mxu0 0.0
        %1527 = vmatpush1.msra.mxu0 %v1506
        %1528 = vmatprep.subr.mxu0 0.0
        %1529 = vmatpush1.msra.mxu0 %v1507
        %1530 = vmatprep.subr.mxu0 0.0
        %1531 = vmatpush1.msra.mxu0 %v1508
        %1532 = vmatprep.subr.mxu0 0.0
        %1533 = vmatpush1.msra.mxu0 %v1509
        %1534 = vmatprep.subr.mxu0 0.0
        %1535 = vmatpush1.msra.mxu0 %v1510
        %1536 = vmatprep.subr.mxu0 0.0
        %1537 = vmatpush1.msra.mxu0 %v1511
        %1538 = vmatprep.subr.mxu0 0.0
        %1539 = vmatpush1.msra.mxu0 %v1512
        %1540 = vmatprep.subr.mxu0 0.0
        %1541 = vmatpush1.msra.mxu0 %v1513
        %1542 = vmatprep.subr.mxu0 0.0
        %1543 = vmatpush1.msra.mxu0 %v1514
        %1544 = vmatprep.subr.mxu0 0.0
        %1545 = vmatpush1.msra.mxu0 %v1515
        %1546 = vmatprep.subr.mxu0 0.0
        %1547 = vmatpush1.msra.mxu0 %v1516
        %1548 = vmatprep.subr.mxu0 0.0
        %1549 = vmatpush1.msra.mxu0 %v1517
        %1550 = vmatprep.subr.mxu0 0.0
        %1551 = vmatpush1.msra.mxu0 %v1518
        %1552 = vmatprep.subr.mxu0 0.0
        %1553 = vmatpush1.msra.mxu0 %v1519
        %1554 = vmatprep.subr.mxu0 0.0
        %1555 = vmatpush1.msra.mxu0 %v1520
        %1556 = vmatprep.subr.mxu0 0.0
        %1557 = vmatpush1.msra.mxu0 %v1521
        %1558 = vmatprep.subr.mxu0 0.0
        %1559 = vmatpush1.msra.mxu0 0.0
        %1560 = vmatprep.subr.mxu0 0.0
        %1561 = vmatpush1.msra.mxu0 0.0
        %1562 = vmatprep.subr.mxu0 0.0
        %1563 = vmatpush1.msra.mxu0 0.0
        %1564 = vmatprep.subr.mxu0 0.0
        %1565 = vmatpush1.msra.mxu0 0.0
        %1566 = vmatprep.subr.mxu0 0.0
        %1567 = vmatpush1.msra.mxu0 0.0
        %1568 = vmatprep.subr.mxu0 0.0
        %1569 = vmatpush1.msra.mxu0 0.0
        %1570 = vmatprep.subr.mxu0 0.0
        %1571 = vmatpush1.msra.mxu0 0.0
        %1572 = vmatprep.subr.mxu0 0.0
        %1573 = vmatpush1.msra.mxu0 0.0
        %1574 = vmatprep.subr.mxu0 0.0
        %1575 = vmatpush1.msra.mxu0 0.0
        %1576 = vmatprep.subr.mxu0 0.0
        %1577 = vmatpush1.msra.mxu0 0.0
        %1578 = vmatprep.subr.mxu0 0.0
        %1579 = vmatpush1.msra.mxu0 0.0
        %1580 = vmatprep.subr.mxu0 0.0
        %1581 = vmatpush1.msra.mxu0 0.0
        %1582 = vmatprep.subr.mxu0 0.0
        %1583 = vmatpush1.msra.mxu0 0.0
        %1584 = vmatprep.subr.mxu0 0.0
        %1585 = vmatpush1.msra.mxu0 0.0
        %1586 = vmatprep.subr.mxu0 0.0
        %1587 = vmatpush1.msra.mxu0 0.0
        %1588 = vmatprep.subr.mxu0 0.0
        %1589 = vmatpush1.msra.mxu0 0.0
        %1590 = vmatprep.mubr.f32.mxu0 0.0
        %1591 = vmatmul.mubr.f32.gmra.mrb[0].mxu0 %v1505
        %v1592 = vpop.f32.mrb[0].mxu0
        %v1593 = vadd.f32 %v1525, %v1592
        %v1594 = vpop.f32.mrb[0].mxu0
        %1595 = vdwg.mxu0
        %v1596 = vadd.f32 %v1423, %v1593
        %v1597 = vsel %vm405, %v1596, 0.0
        %1598 = vadd.xlane.f32.xlu0 %v1597
        %v1599 = vpop.xlane.xlu0 %1598
        %v1600 = vmul.f32 %v1599, %v1403
        %v1601 = vsub.f32 %v1596, %v1600
        %v1602 = vmul.f32 %v1601, %v1601
        %v1603 = vsel %vm405, %v1602, 0.0
        %1604 = vadd.xlane.f32.xlu0 %v1603
        %v1605 = vpop.xlane.xlu0 %1604
        %v1606 = vmul.f32 %v1605, %v1403
        %v1607 = vadd.f32 %v1606, 1e-05
        %v1608 = vrsqrt.pop %v1607
        %v1609 = vmul.f32 %v1601, %v1608
        %v1610 = vlaneseq
        %v1611 = vshrl.u32 %v1610, 7
        %v1612 = vsub.s32 7, %v1611
        %v1613 = vrot.slane %v395, %v1612
        %v1614 = vmul.f32 %v1609, %v1613
        %v1615 = vlaneseq
        %v1616 = vshrl.u32 %v1615, 7
        %v1617 = vsub.s32 0, %v1616
        %v1618 = vrot.slane %v396, %v1617
        %v1619 = vadd.f32 %v1614, %v1618
        %1620 = vst.msk [vmem:[%s391] sm:$0xff] %vm405, %v1619
        %s1621 = sand.u32 %s219, 1
        %s1622 = scalar_lea.sflag [#allocation4], %s1621
        %s1623 = sand.u32 %s219, 1
        %s1624 = smul.addr %s1623, 8
        %s1625 = scalar_lea.vmem [#allocation8], %s1624
        // Predicated region
        $region65: #{tpu_custom_call.1} parent=51 // pred_check
          %p1626 = pneg %p229
        $region66: #{tpu_custom_call.1} parent=51 // pred_check_branch
          %1628 = sbr.rel (%p1626) target = $region68
        $region67: #{tpu_custom_call.1} parent=51 // pred_region
          %s1630 = ssub.s32 128, 128
          %1631 = vsyncadd %s1622, %s1630
          %s1632 = smul.addr %s28, 128
          %s1633 = scalar_lea.hbm %s8, %s1632
          %s1635 = sshll.u32 %s1625, 4
          %s1636 = int_to_ptr.vmem [resolvable:$true] %s1635
          %1638 = dma.vmem_to_hbm [thread:$0]  %s1636, 128, %s1633, %s1622
        $region68: #{tpu_custom_call.1} parent=51 // pred_fallthru
          _
      $region52: #{tpu_custom_call.1} parent=5 // pred_fallthru
        _
      %p1639 = scmp.le.s32.totalorder 2, %s23
      // Predicated region
      $region69: #{tpu_custom_call.1} parent=5 // pred_check
        %p1640 = pneg %p1639
      $region70: #{tpu_custom_call.1} parent=5 // pred_check_branch
        %1642 = sbr.rel (%p1640) target = $region72
      $region71: #{tpu_custom_call.1} parent=5 // pred_region
        %s1643 = ssub.s32 %s23, 2
        // Predicated region
        $region73: #{tpu_custom_call.1} parent=71 // pred_check
          %p1644 = pneg %p235
        $region74: #{tpu_custom_call.1} parent=71 // pred_check_branch
          %1646 = sbr.rel (%p1644) target = $region76
        $region75: #{tpu_custom_call.1} parent=71 // pred_region
          %s1647 = sand.u32 %s220, 1
          %s1648 = scalar_lea.sflag [#allocation4], %s1647
          %s1649 = sand.u32 %s220, 1
          %s1650 = smul.addr %s1649, 8
          %s1651 = scalar_lea.vmem [#allocation8], %s1650
          %1652 = dma.done %s1648, 128
        $region76: #{tpu_custom_call.1} parent=71 // pred_fallthru
          _
      $region72: #{tpu_custom_call.1} parent=5 // pred_fallthru
        _
    $region6: #{tpu_custom_call.1} parent=1 // loop_footer
      %s27 = sadd.s32 1, %s23
    $region7: #{tpu_custom_call.1} parent=1 // loop_footer_branch
      %22 = sbr.rel target = $region3
    $region8: #{tpu_custom_call.1} parent=1 // loop_exit
      _
    %1653 = vsyncpa [#allocation3], 1
    %s1654 = scalar_lea.sflag [#allocation3], 1
    %1655 = vsyncpa %s1654, 1
    %1656 = vsyncpa [#allocation6], 1
    %s1657 = scalar_lea.sflag [#allocation6], 1
    %1658 = vsyncpa %s1657, 1
    %1659 = vsyncpa [#allocation4], 1
    %s1660 = scalar_lea.sflag [#allocation4], 1
    %1661 = vsyncpa %s1660, 1

</llo_original>
